<compile_context>
chip_gen: v6e
topology: v6e:2x2x1
jax: 0.10.0
libtpu: 0.0.40
codegen_flags: <defaults>
</compile_context>

<pallas_src>
import functools

import jax
import jax.numpy as jnp
from jax.experimental import pallas as pl
from jax.experimental.pallas import tpu as pltpu


def _round_up(x, m):
    return ((x + m - 1) // m) * m


def _vmem_budget_and_limit():
    """Per-generation VMEM budget: v5e/v6e have 128 MiB per core, v7x only 64 MiB."""
    cap = 64 * 1024 * 1024
    try:
        info = pltpu.get_tpu_info()
        cap = int(getattr(info, "vmem_capacity_bytes", cap)) or cap
    except Exception:
        pass
    if cap >= 96 * 1024 * 1024:                       # v5e / v6e class (128 MiB VMEM)
        return 56 * 1024 * 1024, 96 * 1024 * 1024
    return 24 * 1024 * 1024, 48 * 1024 * 1024         # v7x class (64 MiB VMEM per TC)


def _block_vmem_bytes(tb, lin_p, lout_p, e, k, cp, ncp):
    """Rough VMEM footprint of one grid step (double-buffered blocks, resident weights,
    f32 conv accumulator + matmul/slice temporaries)."""
    act_block = tb * lin_p * e * 2                    # bf16 raw embedding block
    out_block = tb * ncp * 4                          # f32 logits block
    weights = k * e * cp * 2 + cp * 4 + cp * ncp * 2 + ncp * 4
    conv_tmp = tb * lout_p * cp * 4                   # f32 accumulator / tap temporaries
    return 2 * act_block + 2 * out_block + weights + 3 * conv_tmp


def _choose_batch_tile(b, lin_p, lout_p, e, k, cp, ncp, budget_bytes):
    """Largest multiple-of-8 batch tile fitting the VMEM budget; when the batch allows,
    prefer >= 2 grid steps (even count) so both v7x TensorCores get work."""
    b8 = _round_up(max(b, 1), 8)
    fits = [tb for tb in range(b8, 7, -8)
            if _block_vmem_bytes(tb, lin_p, lout_p, e, k, cp, ncp) <= budget_bytes]
    if not fits:
        return 8
    if b <= 8:
        return fits[0]
    def steps(tb):
        return -(-b // tb)
    multi = [tb for tb in fits if steps(tb) >= 2]
    if not multi:
        return fits[-1]
    even = [tb for tb in multi if steps(tb) % 2 == 0]
    return even[0] if even else multi[0]


def textcnn_kernel(x_ref, wconv_ref, bconv_ref, wfc_ref, bfc_ref, o_ref, *,
                   tb, out_pad, out_valid, ksize):
    """Fused Conv1d (K-tap, in-kernel) + global max-pool + bias + ReLU + Linear.

    x_ref:     (TB, Lp, E)  bf16  raw embedded tokens (time zero-padded)
    wconv_ref: (K, E, Cp)   bf16  conv weight, per-tap (E, Cp) slices, channel-padded
    bconv_ref: (1, Cp)      f32   conv bias (padded)
    wfc_ref:   (Cp, NCp)    bf16  fc weight (padded)
    bfc_ref:   (1, NCp)     f32   fc bias (padded)
    o_ref:     (TB, NCp)    f32   logits (padded)
    """
    e = x_ref.shape[-1]
    cp = wconv_ref.shape[-1]

    # Conv1d as K accumulated MXU matmuls: for tap k the LHS is the sublane-offset
    # window x[:, k:k+Loutp, :] flattened to (TB*Loutp, E); contraction depth E = 128.
    acc = None
    for k in range(ksize):
        xk = x_ref[:, pl.ds(k, out_pad), :].reshape(tb * out_pad, e)   # bf16
        yk = jnp.dot(xk, wconv_ref[k], preferred_element_type=jnp.float32)
        acc = yk if acc is None else acc + yk
    acc = acc.reshape(tb, out_pad, cp)                                 # (TB, Loutp, Cp) f32

    # Mask padded time rows so they cannot win the max (skip when no padding).
    if out_valid < out_pad:
        t = jax.lax.broadcasted_iota(jnp.int32, (1, out_pad, cp), 1)
        mask = jnp.where(t < out_valid, 0.0, -1e30).astype(jnp.float32)
        acc = acc + mask                                               # broadcast over TB

    # AdaptiveMaxPool1d(1); bias add + ReLU commute with the max (monotone), so apply
    # them on the pooled (TB, Cp) tensor instead of the full (TB, Loutp, Cp) activation.
    pooled = jnp.max(acc, axis=1)                                      # (TB, Cp)
    pooled = jnp.maximum(pooled + bconv_ref[...], 0.0)

    logits = jnp.dot(pooled.astype(wfc_ref.dtype), wfc_ref[...],
                     preferred_element_type=jnp.float32) + bfc_ref[...]
    o_ref[...] = logits.astype(o_ref.dtype)


def init_params(key, vocab_size, num_classes, embed_dim=128, conv_channels=100, kernel_size=5):
    """Deterministic synthetic parameters matching TextCNN.__init__ shapes."""
    k_emb, k_wc, k_bc, k_wf, k_bf = jax.random.split(key, 5)
    emb_table = jax.random.normal(k_emb, (vocab_size, embed_dim), jnp.float32)
    # PyTorch Conv1d weight layout: (out_channels, in_channels, kernel) = (C, E, K)
    wconv_torch = jax.random.normal(k_wc, (conv_channels, embed_dim, kernel_size), jnp.float32) * 0.05
    wconv = jnp.transpose(wconv_torch, (2, 1, 0))     # -> (K, E, C)
    bconv = jax.random.normal(k_bc, (1, conv_channels), jnp.float32) * 0.05
    # PyTorch Linear weight layout: (out_features, in_features) = (NC, C)
    wfc_torch = jax.random.normal(k_wf, (num_classes, conv_channels), jnp.float32) * 0.05
    wfc = wfc_torch.T                                 # -> (C, NC)
    bfc = jax.random.normal(k_bf, (1, num_classes), jnp.float32) * 0.05
    return dict(emb_table=emb_table, wconv=wconv, bconv=bconv, wfc=wfc, bfc=bfc)


def textcnn_forward(input_ids, attention_mask, params, *, batch_tile=None, vmem_budget_bytes=None):
    """Matches TextCNN.forward(input_ids, attention_mask); attention_mask is unused there."""
    del attention_mask                                # unused in the reference forward
    emb_table = params["emb_table"]
    wconv, bconv = params["wconv"], params["bconv"]   # (K, E, C), (1, C)
    wfc, bfc = params["wfc"], params["bfc"]           # (C, NC),  (1, NC)

    vocab_size, embed_dim = emb_table.shape
    K, _, C = wconv.shape
    NC = wfc.shape[-1]
    B, L = input_ids.shape
    Lout = L - K + 1
    assert Lout >= 1, "sequence shorter than conv kernel"

    # Embedding gather stays in plain JAX.
    # TODO(synk): fuse the row gather into the kernel (PrefetchScalarGridSpec ids in SMEM +
    # per-row DMA from the embedding table) to remove one HBM round-trip of the activations.
    ids = jnp.minimum(input_ids, vocab_size - 1)      # .clamp(max=num_embeddings - 1)
    x = jnp.take(emb_table, ids, axis=0).astype(jnp.bfloat16)        # (B, L, E)

    # Lane/sublane padding: channels -> 128 lanes, conv-output rows -> multiple of 8,
    # input time rows padded so every tap window x[:, k:k+Loutp, :] stays in-bounds.
    Cp = _round_up(C, 128)
    NCp = _round_up(NC, 128)
    Loutp = _round_up(Lout, 8)
    Lp = _round_up(Loutp + K - 1, 8)                  # >= L

    budget, limit_cap = _vmem_budget_and_limit()
    if vmem_budget_bytes is not None:
        budget = int(vmem_budget_bytes)

    if batch_tile is None:
        TB = _choose_batch_tile(B, Lp, Loutp, embed_dim, K, Cp, NCp, budget)
    else:
        TB = _round_up(max(int(batch_tile), 1), 8)
    Bp = _round_up(B, TB)
    grid_steps = Bp // TB

    x = jnp.pad(x, ((0, Bp - B), (0, Lp - L), (0, 0)))               # (Bp, Lp, E) bf16

    wconv_p = jnp.pad(wconv, ((0, 0), (0, 0), (0, Cp - C))).astype(jnp.bfloat16)   # (K, E, Cp)
    bconv_p = jnp.pad(bconv, ((0, 0), (0, Cp - C))).astype(jnp.float32)
    wfc_p = jnp.pad(wfc, ((0, Cp - C), (0, NCp - NC))).astype(jnp.bfloat16)
    bfc_p = jnp.pad(bfc, ((0, 0), (0, NCp - NC))).astype(jnp.float32)

    kernel = functools.partial(textcnn_kernel, tb=TB, out_pad=Loutp, out_valid=Lout, ksize=K)

    vmem_need = _block_vmem_bytes(TB, Lp, Loutp, embed_dim, K, Cp, NCp)
    vmem_limit = int(min(limit_cap, max(32 * 1024 * 1024, 2 * vmem_need)))

    flops = 2 * Bp * Loutp * K * embed_dim * Cp + 2 * Bp * Cp * NCp
    bytes_accessed = (x.size * 2 + wconv_p.size * 2 + wfc_p.size * 2
                      + bconv_p.size * 4 + bfc_p.size * 4 + Bp * NCp * 4)

    out = pl.pallas_call(
        kernel,
        out_shape=jax.ShapeDtypeStruct((Bp, NCp), jnp.float32),
        grid=(grid_steps,),
        in_specs=[
            pl.BlockSpec((TB, Lp, embed_dim), lambda i: (i, 0, 0)),   # activations: tiled over batch
            pl.BlockSpec((K, embed_dim, Cp), lambda i: (0, 0, 0)),    # weights: resident across steps
            pl.BlockSpec((1, Cp), lambda i: (0, 0)),
            pl.BlockSpec((Cp, NCp), lambda i: (0, 0)),
            pl.BlockSpec((1, NCp), lambda i: (0, 0)),
        ],
        out_specs=pl.BlockSpec((TB, NCp), lambda i: (i, 0)),
        compiler_params=pltpu.CompilerParams(
            dimension_semantics=("parallel",),        # batch axis shards across v7x's 2 TCs
            vmem_limit_bytes=vmem_limit,
        ),
        cost_estimate=pl.CostEstimate(flops=int(flops), transcendentals=0,
                                      bytes_accessed=int(bytes_accessed)),
    )(x, wconv_p, bconv_p, wfc_p, bfc_p)

    return out[:B, :NC]


def textcnn_reference(input_ids, attention_mask, params):
    """Pure-JAX f32 reference matching the PyTorch forward, for validation."""
    del attention_mask
    emb_table = params["emb_table"]
    wconv, bconv = params["wconv"], params["bconv"]
    wfc, bfc = params["wfc"], params["bfc"]
    K = wconv.shape[0]
    ids = jnp.minimum(input_ids, emb_table.shape[0] - 1)
    x = jnp.take(emb_table, ids, axis=0)                    # (B, L, E)
    Lout = x.shape[1] - K + 1
    conv = sum(jnp.einsum("ble,ec->blc", x[:, k:k + Lout, :], wconv[k]) for k in range(K))
    conv = jnp.maximum(conv + bconv, 0.0)                   # bias + ReLU
    pooled = jnp.max(conv, axis=1)                          # AdaptiveMaxPool1d(1)
    return pooled @ wfc + bfc


if __name__ == "__main__":
    # Small deterministic example shapes implied by the forward pass.
    B, L = 18, 16           # batch, sequence length
    VOCAB = 50
    NUM_CLASSES = 8

    root = jax.random.PRNGKey(0)
    k_params, k_ids = jax.random.split(root)
    params = init_params(k_params, VOCAB, NUM_CLASSES)

    # ids deliberately go past vocab to exercise the clamp in forward().
    input_ids = jax.random.randint(k_ids, (B, L), 0, VOCAB + 5, dtype=jnp.int32)
    attention_mask = jnp.ones((B, L), dtype=jnp.int32)

    # Auto tile selection: TB=16 -> 2 even grid steps (exercises the tiled/pipelined path
    # and feeds both TensorCores on v7x).
    logits = textcnn_forward(input_ids, attention_mask, params)
    logits = jax.block_until_ready(logits)

    assert logits.shape == (B, NUM_CLASSES)
    assert logits.dtype == jnp.float32

    ref = textcnn_reference(input_ids, attention_mask, params)
    max_err = float(jnp.max(jnp.abs(logits - ref)))
    assert jnp.allclose(logits, ref, atol=1e-1, rtol=1e-1), f"max abs err {max_err}"

    print("KERNEL_OK")
</pallas_src>

<mosaic_0001>
module attributes {stable_mosaic.version = 11 : i64} {
  func.func @textcnn_kernel(%arg0: i32, %arg1: memref<16x24x128xbf16, #tpu.memory_space<vmem>>, %arg2: memref<5x128x128xbf16, #tpu.memory_space<vmem>>, %arg3: memref<1x128xf32, #tpu.memory_space<vmem>>, %arg4: memref<128x128xbf16, #tpu.memory_space<vmem>>, %arg5: memref<1x128xf32, #tpu.memory_space<vmem>>, %arg6: memref<16x128xf32, #tpu.memory_space<vmem>>) attributes {dimension_semantics = [#tpu.dimension_semantics<parallel>], iteration_bounds = array<i64: 2>, scalar_prefetch = 0 : i64, scratch_operands = 0 : i64, tpu.core_type = #tpu.core_type<tc>, window_params = [{transform_indices = @transform_0, window_bounds = array<i64: 16, 24, 128>}, {pipeline_mode = #tpu.pipeline_mode<synchronous>, transform_indices = @transform_1, window_bounds = array<i64: 5, 128, 128>}, {pipeline_mode = #tpu.pipeline_mode<synchronous>, transform_indices = @transform_2, window_bounds = array<i64: 1, 128>}, {pipeline_mode = #tpu.pipeline_mode<synchronous>, transform_indices = @transform_3, window_bounds = array<i64: 128, 128>}, {pipeline_mode = #tpu.pipeline_mode<synchronous>, transform_indices = @transform_4, window_bounds = array<i64: 1, 128>}, {transform_indices = @transform_5, window_bounds = array<i64: 16, 128>}]} {
    %c0 = arith.constant 0 : index
    %c0_0 = arith.constant 0 : index
    %c0_1 = arith.constant 0 : index
    %0 = vector.load %arg1[%c0, %c0_0, %c0_1] : memref<16x24x128xbf16, #tpu.memory_space<vmem>>, vector<16x16x128xbf16>
    %1 = vector.shape_cast %0 : vector<16x16x128xbf16> to vector<256x128xbf16>
    %c0_2 = arith.constant 0 : index
    %c0_3 = arith.constant 0 : index
    %c0_4 = arith.constant 0 : index
    %2 = vector.load %arg2[%c0_2, %c0_3, %c0_4] : memref<5x128x128xbf16, #tpu.memory_space<vmem>>, vector<1x128x128xbf16>
    %3 = vector.shape_cast %2 : vector<1x128x128xbf16> to vector<128x128xbf16>
    %cst = arith.constant dense<0.000000e+00> : vector<256x128xf32>
    %4 = tpu.matmul %1, %3, %cst {dimension_numbers = #tpu.dot_dimension_numbers<[1], [0], [0], [1], [0, 0, 1, 1], [], []>} : vector<256x128xbf16>, vector<128x128xbf16>, vector<256x128xf32> -> vector<256x128xf32>
    %c0_5 = arith.constant 0 : index
    %c1 = arith.constant 1 : index
    %c0_6 = arith.constant 0 : index
    %5 = vector.load %arg1[%c0_5, %c1, %c0_6] : memref<16x24x128xbf16, #tpu.memory_space<vmem>>, vector<16x16x128xbf16>
    %6 = vector.shape_cast %5 : vector<16x16x128xbf16> to vector<256x128xbf16>
    %c1_7 = arith.constant 1 : index
    %c0_8 = arith.constant 0 : index
    %c0_9 = arith.constant 0 : index
    %7 = vector.load %arg2[%c1_7, %c0_8, %c0_9] : memref<5x128x128xbf16, #tpu.memory_space<vmem>>, vector<1x128x128xbf16>
    %8 = vector.shape_cast %7 : vector<1x128x128xbf16> to vector<128x128xbf16>
    %cst_10 = arith.constant dense<0.000000e+00> : vector<256x128xf32>
    %9 = tpu.matmul %6, %8, %cst_10 {dimension_numbers = #tpu.dot_dimension_numbers<[1], [0], [0], [1], [0, 0, 1, 1], [], []>} : vector<256x128xbf16>, vector<128x128xbf16>, vector<256x128xf32> -> vector<256x128xf32>
    %10 = arith.addf %4, %9 : vector<256x128xf32>
    %c0_11 = arith.constant 0 : index
    %c2 = arith.constant 2 : index
    %c0_12 = arith.constant 0 : index
    %11 = vector.load %arg1[%c0_11, %c2, %c0_12] : memref<16x24x128xbf16, #tpu.memory_space<vmem>>, vector<16x16x128xbf16>
    %12 = vector.shape_cast %11 : vector<16x16x128xbf16> to vector<256x128xbf16>
    %c2_13 = arith.constant 2 : index
    %c0_14 = arith.constant 0 : index
    %c0_15 = arith.constant 0 : index
    %13 = vector.load %arg2[%c2_13, %c0_14, %c0_15] : memref<5x128x128xbf16, #tpu.memory_space<vmem>>, vector<1x128x128xbf16>
    %14 = vector.shape_cast %13 : vector<1x128x128xbf16> to vector<128x128xbf16>
    %cst_16 = arith.constant dense<0.000000e+00> : vector<256x128xf32>
    %15 = tpu.matmul %12, %14, %cst_16 {dimension_numbers = #tpu.dot_dimension_numbers<[1], [0], [0], [1], [0, 0, 1, 1], [], []>} : vector<256x128xbf16>, vector<128x128xbf16>, vector<256x128xf32> -> vector<256x128xf32>
    %16 = arith.addf %10, %15 : vector<256x128xf32>
    %c0_17 = arith.constant 0 : index
    %c3 = arith.constant 3 : index
    %c0_18 = arith.constant 0 : index
    %17 = vector.load %arg1[%c0_17, %c3, %c0_18] : memref<16x24x128xbf16, #tpu.memory_space<vmem>>, vector<16x16x128xbf16>
    %18 = vector.shape_cast %17 : vector<16x16x128xbf16> to vector<256x128xbf16>
    %c3_19 = arith.constant 3 : index
    %c0_20 = arith.constant 0 : index
    %c0_21 = arith.constant 0 : index
    %19 = vector.load %arg2[%c3_19, %c0_20, %c0_21] : memref<5x128x128xbf16, #tpu.memory_space<vmem>>, vector<1x128x128xbf16>
    %20 = vector.shape_cast %19 : vector<1x128x128xbf16> to vector<128x128xbf16>
    %cst_22 = arith.constant dense<0.000000e+00> : vector<256x128xf32>
    %21 = tpu.matmul %18, %20, %cst_22 {dimension_numbers = #tpu.dot_dimension_numbers<[1], [0], [0], [1], [0, 0, 1, 1], [], []>} : vector<256x128xbf16>, vector<128x128xbf16>, vector<256x128xf32> -> vector<256x128xf32>
    %22 = arith.addf %16, %21 : vector<256x128xf32>
    %c0_23 = arith.constant 0 : index
    %c4 = arith.constant 4 : index
    %c0_24 = arith.constant 0 : index
    %23 = vector.load %arg1[%c0_23, %c4, %c0_24] : memref<16x24x128xbf16, #tpu.memory_space<vmem>>, vector<16x16x128xbf16>
    %24 = vector.shape_cast %23 : vector<16x16x128xbf16> to vector<256x128xbf16>
    %c4_25 = arith.constant 4 : index
    %c0_26 = arith.constant 0 : index
    %c0_27 = arith.constant 0 : index
    %25 = vector.load %arg2[%c4_25, %c0_26, %c0_27] : memref<5x128x128xbf16, #tpu.memory_space<vmem>>, vector<1x128x128xbf16>
    %26 = vector.shape_cast %25 : vector<1x128x128xbf16> to vector<128x128xbf16>
    %cst_28 = arith.constant dense<0.000000e+00> : vector<256x128xf32>
    %27 = tpu.matmul %24, %26, %cst_28 {dimension_numbers = #tpu.dot_dimension_numbers<[1], [0], [0], [1], [0, 0, 1, 1], [], []>} : vector<256x128xbf16>, vector<128x128xbf16>, vector<256x128xf32> -> vector<256x128xf32>
    %28 = arith.addf %22, %27 : vector<256x128xf32>
    %29 = vector.shape_cast %28 : vector<256x128xf32> to vector<16x16x128xf32>
    %30 = tpu.iota {dimensions = array<i32: 1>} : vector<1x16x128xi32>
    %c12_i32 = arith.constant 12 : i32
    %31 = vector.broadcast %c12_i32 : i32 to vector<1x16x128xi32>
    %32 = arith.cmpi slt, %30, %31 : vector<1x16x128xi32>
    %cst_29 = arith.constant 0.000000e+00 : f32
    %cst_30 = arith.constant -1.000000e+30 : f32
    %33 = vector.broadcast %cst_29 : f32 to vector<1x16x128xf32>
    %34 = vector.broadcast %cst_30 : f32 to vector<1x16x128xf32>
    %35 = arith.select %32, %33, %34 : vector<1x16x128xi1>, vector<1x16x128xf32>
    %36 = vector.broadcast %35 : vector<1x16x128xf32> to vector<16x16x128xf32>
    %37 = arith.addf %29, %36 : vector<16x16x128xf32>
    %cst_31 = arith.constant dense<0xFF800000> : vector<16x128xf32>
    %38 = vector.multi_reduction <maximumf>, %37, %cst_31 [1] : vector<16x16x128xf32> to vector<16x128xf32>
    %c0_32 = arith.constant 0 : index
    %c0_33 = arith.constant 0 : index
    %39 = vector.load %arg3[%c0_32, %c0_33] : memref<1x128xf32, #tpu.memory_space<vmem>>, vector<1x128xf32>
    %40 = vector.broadcast %39 : vector<1x128xf32> to vector<16x128xf32>
    %41 = arith.addf %38, %40 : vector<16x128xf32>
    %cst_34 = arith.constant 0.000000e+00 : f32
    %42 = vector.broadcast %cst_34 : f32 to vector<16x128xf32>
    %43 = arith.maximumf %41, %42 : vector<16x128xf32>
    %44 = arith.truncf %43 : vector<16x128xf32> to vector<16x128xbf16>
    %c0_35 = arith.constant 0 : index
    %c0_36 = arith.constant 0 : index
    %45 = vector.load %arg4[%c0_35, %c0_36] : memref<128x128xbf16, #tpu.memory_space<vmem>>, vector<128x128xbf16>
    %cst_37 = arith.constant dense<0.000000e+00> : vector<16x128xf32>
    %46 = tpu.matmul %44, %45, %cst_37 {dimension_numbers = #tpu.dot_dimension_numbers<[1], [0], [0], [1], [0, 0, 1, 1], [], []>} : vector<16x128xbf16>, vector<128x128xbf16>, vector<16x128xf32> -> vector<16x128xf32>
    %c0_38 = arith.constant 0 : index
    %c0_39 = arith.constant 0 : index
    %47 = vector.load %arg5[%c0_38, %c0_39] : memref<1x128xf32, #tpu.memory_space<vmem>>, vector<1x128xf32>
    %48 = vector.broadcast %47 : vector<1x128xf32> to vector<16x128xf32>
    %49 = arith.addf %46, %48 : vector<16x128xf32>
    %c0_40 = arith.constant 0 : index
    %c0_41 = arith.constant 0 : index
    %50 = vector.load %arg6[%c0_40, %c0_41] : memref<16x128xf32, #tpu.memory_space<vmem>>, vector<16x128xf32>
    tpu.vector_store %arg6[%c0_40, %c0_41], %49 {strides = array<i32>} : memref<16x128xf32, #tpu.memory_space<vmem>>, vector<16x128xf32>,
    return
  }
  func.func @transform_0(%arg0: i32) -> (i32, i32, i32) {
    %c0_i32 = arith.constant 0 : i32
    %c0_i32_0 = arith.constant 0 : i32
    %c0_i32_1 = arith.constant 0 : i32
    return %arg0, %c0_i32, %c0_i32_0 : i32, i32, i32
  }
  func.func @transform_1(%arg0: i32) -> (i32, i32, i32) {
    %c0_i32 = arith.constant 0 : i32
    %c0_i32_0 = arith.constant 0 : i32
    %c0_i32_1 = arith.constant 0 : i32
    %c0_i32_2 = arith.constant 0 : i32
    return %c0_i32, %c0_i32_0, %c0_i32_1 : i32, i32, i32
  }
  func.func @transform_2(%arg0: i32) -> (i32, i32) {
    %c0_i32 = arith.constant 0 : i32
    %c0_i32_0 = arith.constant 0 : i32
    %c0_i32_1 = arith.constant 0 : i32
    return %c0_i32, %c0_i32_0 : i32, i32
  }
  func.func @transform_3(%arg0: i32) -> (i32, i32) {
    %c0_i32 = arith.constant 0 : i32
    %c0_i32_0 = arith.constant 0 : i32
    %c0_i32_1 = arith.constant 0 : i32
    return %c0_i32, %c0_i32_0 : i32, i32
  }
  func.func @transform_4(%arg0: i32) -> (i32, i32) {
    %c0_i32 = arith.constant 0 : i32
    %c0_i32_0 = arith.constant 0 : i32
    %c0_i32_1 = arith.constant 0 : i32
    return %c0_i32, %c0_i32_0 : i32, i32
  }
  func.func @transform_5(%arg0: i32) -> (i32, i32) {
    %c0_i32 = arith.constant 0 : i32
    %c0_i32_0 = arith.constant 0 : i32
    return %arg0, %c0_i32 : i32, i32
  }
}

</mosaic_0001>

<llo_original>
// kernel: tpu_custom_call.1
$region0: #{tpu_custom_call.1}
  #allocation0 [shape = 'u32[]', space=smem, size = 0x4, offset = 0x4, fixed_abs, tag = 'smem constant byte address 0x4 - core index']
  #allocation1 [shape = 'u32[144,128]{1,0:T(1,128)}', space=vmem, size = 0x12000, scoped, tag = 'internal scratch']
  %s0 = inlined_call_operand.hbm [shape: bf16[32,24,128], index: 0, kind: input, shape index: {}]
  %s1 = inlined_call_operand.hbm [shape: bf16[5,128,128], index: 1, kind: input, shape index: {}]
  %s2 = inlined_call_operand.vmem [shape: f32[1,128], index: 2, kind: input, shape index: {}]
  %s3 = inlined_call_operand.hbm [shape: bf16[128,128], index: 3, kind: input, shape index: {}]
  %s4 = inlined_call_operand.vmem [shape: f32[1,128], index: 4, kind: input, shape index: {}]
  %s5 = inlined_call_operand.hbm [shape: f32[32,128], index: 5, kind: output, shape index: {}]
  %s6 = sld [smem:[#allocation0]]
  $region65: #{tpu_custom_call.1} parent=0
    _
  %s8 = ssub.s32 1, %s6
  %s9 = scalar_select 0, %s8, %s6
  $region1: #{tpu_custom_call.1} parent=0
    #allocation2 [shape = 'u8[196608]{0}', space=vmem, size = 0x30000, scoped, tag = 'input window, operand 0']
    #allocation3 [shape = 's32[2]{0}', space=sflag, size = 0x8, scoped, tag = 'scoped memory for tpu_custom_call.1']
    #allocation4 [shape = 's32[2]{0}', space=sflag, size = 0x8, scoped, tag = 'scoped memory for tpu_custom_call.1']
    #allocation5 [shape = 'u8[163840]{0}', space=vmem, size = 0x28000, scoped, tag = 'input window, operand 1, single buffered']
    #allocation6 [shape = 's32[1]{0}', space=sflag, size = 0x4, scoped, tag = 'scoped memory for tpu_custom_call.1']
    #allocation7 [shape = 'u8[32768]{0}', space=vmem, size = 0x8000, scoped, tag = 'input window, operand 3, single buffered']
    #allocation8 [shape = 'u8[16384]{0}', space=vmem, size = 0x4000, scoped, tag = 'output window, operand 0']
    %10 = vsyncpa [#allocation3], 0
    %s11 = scalar_lea.sflag [#allocation3], 1
    %12 = vsyncpa %s11, 0
    %13 = vsyncpa [#allocation6], 0
    %14 = vsyncpa [#allocation4], 0
    %s15 = scalar_lea.sflag [#allocation4], 1
    %16 = vsyncpa %s15, 0
    loop: start=0, step=1, limit=4
    $region2: #{tpu_custom_call.1} parent=1 // loop_pre_header
      _
    $region3: #{tpu_custom_call.1} parent=1 // loop_header
      %s18 = sphi 0, %s22
      %p19 = scmp.ge.s32.totalorder %s18, 4
      %s28 = sphi 0, %s30
      %s31 = sphi 0, %s28
      %s32 = sphi 0, %s31
      %s48 = sphi 0, %s32
      %s52 = sphi 0, %s52
      %s54 = sphi 0, %s52
      %s55 = sphi 0, %s54
      %s69 = sphi 0, %s55
      %s73 = sphi 0, %s73
      %s75 = sphi 0, %s73
      %s76 = sphi 0, %s75
      %s90 = sphi 0, %s76
      %s94 = sphi 0, %s94
      %s96 = sphi 0, %s94
      %s97 = sphi 0, %s96
      %s111 = sphi 0, %s97
      %s115 = sphi 0, %s115
      %s117 = sphi 0, %s115
      %s118 = sphi 0, %s117
      %s132 = sphi 0, %s118
      %s138 = sphi 0, %s140
      %s141 = sphi 0, %s138
      %s142 = sphi 0, %s141
      %s158 = sphi 0, %s142
    $region4: #{tpu_custom_call.1} parent=1 // loop_header_branch
      %21 = sbr.rel (%p19) target = $region8
    $region5: #{tpu_custom_call.1} parent=1 // loop_body
      %s23 = ssub.s32 %s18, 1
      %s24 = ssub.s32 %s18, 2
      %s25 = sadd.s32 %s18, 1
      %s26 = ssub.s32 %s18, %s25
      %p27 = scmp.eq.s32.totalorder %s26, 0
      %s29 = sadd.s32 %s28, 1
      %s30 = scalar_select %p27, %s28, %s29
      %p33 = pneg %p27
      %p34 = scmp.eq.s32.totalorder %s18, 1
      %p35 = por %p33, %p34
      %p36 = scmp.ne.s32.totalorder %s28, %s31
      %p37 = scmp.eq.s32.totalorder %s18, 0
      %p38 = por %p36, %p37
      %p39 = scmp.ne.s32.totalorder %s28, %s31
      %p40 = scmp.eq.s32.totalorder %s23, 1
      %p41 = por %p39, %p40
      %p42 = scmp.ne.s32.totalorder %s31, %s32
      %p43 = scmp.eq.s32.totalorder %s23, 0
      %p44 = por %p42, %p43
      %p45 = scmp.ne.s32.totalorder %s31, %s32
      %p46 = scmp.eq.s32.totalorder %s24, 1
      %p47 = por %p45, %p46
      %p49 = scmp.ne.s32.totalorder %s32, %s48
      %p50 = scmp.eq.s32.totalorder %s24, 0
      %p51 = por %p49, %p50
      %s53 = sadd.s32 %s52, 1
      %p56 = scmp.eq.s32.totalorder %s18, 1
      %p57 = scmp.ne.s32.totalorder %s52, %s54
      %p58 = scmp.eq.s32.totalorder %s18, 0
      %p59 = por %p57, %p58
      %p60 = scmp.ne.s32.totalorder %s52, %s54
      %p61 = scmp.eq.s32.totalorder %s23, 1
      %p62 = por %p60, %p61
      %p63 = scmp.ne.s32.totalorder %s54, %s55
      %p64 = scmp.eq.s32.totalorder %s23, 0
      %p65 = por %p63, %p64
      %p66 = scmp.ne.s32.totalorder %s54, %s55
      %p67 = scmp.eq.s32.totalorder %s24, 1
      %p68 = por %p66, %p67
      %p70 = scmp.ne.s32.totalorder %s55, %s69
      %p71 = scmp.eq.s32.totalorder %s24, 0
      %p72 = por %p70, %p71
      %s74 = sadd.s32 %s73, 1
      %p77 = scmp.eq.s32.totalorder %s18, 1
      %p78 = scmp.ne.s32.totalorder %s73, %s75
      %p79 = scmp.eq.s32.totalorder %s18, 0
      %p80 = por %p78, %p79
      %p81 = scmp.ne.s32.totalorder %s73, %s75
      %p82 = scmp.eq.s32.totalorder %s23, 1
      %p83 = por %p81, %p82
      %p84 = scmp.ne.s32.totalorder %s75, %s76
      %p85 = scmp.eq.s32.totalorder %s23, 0
      %p86 = por %p84, %p85
      %p87 = scmp.ne.s32.totalorder %s75, %s76
      %p88 = scmp.eq.s32.totalorder %s24, 1
      %p89 = por %p87, %p88
      %p91 = scmp.ne.s32.totalorder %s76, %s90
      %p92 = scmp.eq.s32.totalorder %s24, 0
      %p93 = por %p91, %p92
      %s95 = sadd.s32 %s94, 1
      %p98 = scmp.eq.s32.totalorder %s18, 1
      %p99 = scmp.ne.s32.totalorder %s94, %s96
      %p100 = scmp.eq.s32.totalorder %s18, 0
      %p101 = por %p99, %p100
      %p102 = scmp.ne.s32.totalorder %s94, %s96
      %p103 = scmp.eq.s32.totalorder %s23, 1
      %p104 = por %p102, %p103
      %p105 = scmp.ne.s32.totalorder %s96, %s97
      %p106 = scmp.eq.s32.totalorder %s23, 0
      %p107 = por %p105, %p106
      %p108 = scmp.ne.s32.totalorder %s96, %s97
      %p109 = scmp.eq.s32.totalorder %s24, 1
      %p110 = por %p108, %p109
      %p112 = scmp.ne.s32.totalorder %s97, %s111
      %p113 = scmp.eq.s32.totalorder %s24, 0
      %p114 = por %p112, %p113
      %s116 = sadd.s32 %s115, 1
      %p119 = scmp.eq.s32.totalorder %s18, 1
      %p120 = scmp.ne.s32.totalorder %s115, %s117
      %p121 = scmp.eq.s32.totalorder %s18, 0
      %p122 = por %p120, %p121
      %p123 = scmp.ne.s32.totalorder %s115, %s117
      %p124 = scmp.eq.s32.totalorder %s23, 1
      %p125 = por %p123, %p124
      %p126 = scmp.ne.s32.totalorder %s117, %s118
      %p127 = scmp.eq.s32.totalorder %s23, 0
      %p128 = por %p126, %p127
      %p129 = scmp.ne.s32.totalorder %s117, %s118
      %p130 = scmp.eq.s32.totalorder %s24, 1
      %p131 = por %p129, %p130
      %p133 = scmp.ne.s32.totalorder %s118, %s132
      %p134 = scmp.eq.s32.totalorder %s24, 0
      %p135 = por %p133, %p134
      %s136 = ssub.s32 %s18, %s25
      %p137 = scmp.eq.s32.totalorder %s136, 0
      %s139 = sadd.s32 %s138, 1
      %s140 = scalar_select %p137, %s138, %s139
      %p143 = pneg %p137
      %p144 = scmp.eq.s32.totalorder %s18, 1
      %p145 = por %p143, %p144
      %p146 = scmp.ne.s32.totalorder %s138, %s141
      %p147 = scmp.eq.s32.totalorder %s18, 0
      %p148 = por %p146, %p147
      %p149 = scmp.ne.s32.totalorder %s138, %s141
      %p150 = scmp.eq.s32.totalorder %s23, 1
      %p151 = por %p149, %p150
      %p152 = scmp.ne.s32.totalorder %s141, %s142
      %p153 = scmp.eq.s32.totalorder %s23, 0
      %p154 = por %p152, %p153
      %p155 = scmp.ne.s32.totalorder %s141, %s142
      %p156 = scmp.eq.s32.totalorder %s24, 1
      %p157 = por %p155, %p156
      %p159 = scmp.ne.s32.totalorder %s142, %s158
      %p160 = scmp.eq.s32.totalorder %s24, 0
      %p161 = por %p159, %p160
      %p162 = scmp.le.s32.totalorder 1, %s18
      %p163 = scmp.lt.s32.totalorder %s18, 3
      %p164 = pnand %p162, %p163
      %p165 = pneg %p164
      // Predicated region
      $region9: #{tpu_custom_call.1} parent=5 // pred_check
        _
      $region10: #{tpu_custom_call.1} parent=5 // pred_check_branch
        %167 = sbr.rel (%p164) target = $region12
      $region11: #{tpu_custom_call.1} parent=5 // pred_region
        %s168 = ssub.s32 %s18, 1
        // Predicated region
        $region13: #{tpu_custom_call.1} parent=11 // pred_check
          %p169 = pneg %p65
        $region14: #{tpu_custom_call.1} parent=11 // pred_check_branch
          %171 = sbr.rel (%p169) target = $region16
        $region15: #{tpu_custom_call.1} parent=11 // pred_region
          %s173 = ssub.s32 5120, 5120
          %174 = vsyncadd [#allocation6], %s173
          %s175 = sshll.u32 [#allocation5], 4
          %s176 = int_to_ptr.vmem [resolvable:$true] %s175
          %181 = dma.hbm_to_vmem [thread:$0]  %s1, 5120, %s176, [#allocation6], 64, 64, 4
        $region16: #{tpu_custom_call.1} parent=11 // pred_fallthru
          _
        // Predicated region
        $region17: #{tpu_custom_call.1} parent=11 // pred_check
          %p182 = pneg %p86
        $region18: #{tpu_custom_call.1} parent=11 // pred_check_branch
          %184 = sbr.rel (%p182) target = $region20
        $region19: #{tpu_custom_call.1} parent=11 // pred_region
          _
        $region20: #{tpu_custom_call.1} parent=11 // pred_fallthru
          _
        // Predicated region
        $region21: #{tpu_custom_call.1} parent=11 // pred_check
          %p185 = pneg %p107
        $region22: #{tpu_custom_call.1} parent=11 // pred_check_branch
          %187 = sbr.rel (%p185) target = $region24
        $region23: #{tpu_custom_call.1} parent=11 // pred_region
          %s189 = ssub.s32 1024, 1024
          %190 = vsyncadd [#allocation6], %s189
          %s191 = sshll.u32 [#allocation7], 4
          %s192 = int_to_ptr.vmem [resolvable:$true] %s191
          %197 = dma.hbm_to_vmem [thread:$0]  %s3, 1024, %s192, [#allocation6], 64, 64, 4
        $region24: #{tpu_custom_call.1} parent=11 // pred_fallthru
          _
        // Predicated region
        $region25: #{tpu_custom_call.1} parent=11 // pred_check
          %p198 = pneg %p128
        $region26: #{tpu_custom_call.1} parent=11 // pred_check_branch
          %200 = sbr.rel (%p198) target = $region28
        $region27: #{tpu_custom_call.1} parent=11 // pred_region
          _
        $region28: #{tpu_custom_call.1} parent=11 // pred_fallthru
          _
      $region12: #{tpu_custom_call.1} parent=5 // pred_fallthru
        _
      %p201 = scmp.lt.s32.totalorder %s18, 2
      // Predicated region
      $region29: #{tpu_custom_call.1} parent=5 // pred_check
        %p202 = pneg %p201
      $region30: #{tpu_custom_call.1} parent=5 // pred_check_branch
        %204 = sbr.rel (%p202) target = $region32
      $region31: #{tpu_custom_call.1} parent=5 // pred_region
        // Predicated region
        $region33: #{tpu_custom_call.1} parent=31 // pred_check
          %p205 = pneg %p38
        $region34: #{tpu_custom_call.1} parent=31 // pred_check_branch
          %207 = sbr.rel (%p205) target = $region36
        $region35: #{tpu_custom_call.1} parent=31 // pred_region
          %s208 = sand.u32 %s28, 1
          %s209 = scalar_lea.sflag [#allocation3], %s208
          %s210 = sand.u32 %s28, 1
          %s211 = smul.addr %s210, 192
          %s212 = scalar_lea.vmem [#allocation2], %s211
          %s213 = smul.u32 16, %s18
          %s215 = ssub.s32 3072, 3072
          %216 = vsyncadd %s209, %s215
          %s217 = smul.addr %s213, 3
          %s218 = smul.addr %s217, 64
          %s219 = scalar_lea.hbm %s0, %s218
          %s220 = sshll.u32 %s212, 4
          %s221 = int_to_ptr.vmem [resolvable:$true] %s220
          %226 = dma.hbm_to_vmem [thread:$0]  %s219, 3072, %s221, %s209, 64, 64, 4
        $region36: #{tpu_custom_call.1} parent=31 // pred_fallthru
          _
      $region32: #{tpu_custom_call.1} parent=5 // pred_fallthru
        _
      %p227 = scmp.le.s32.totalorder 1, %s18
      %p228 = scmp.lt.s32.totalorder %s18, 3
      %p229 = pnand %p227, %p228
      %p230 = pneg %p229
      // Predicated region
      $region37: #{tpu_custom_call.1} parent=5 // pred_check
        _
      $region38: #{tpu_custom_call.1} parent=5 // pred_check_branch
        %232 = sbr.rel (%p229) target = $region40
      $region39: #{tpu_custom_call.1} parent=5 // pred_region
        %s233 = ssub.s32 %s18, 1
        %s234 = sand.u32 %s31, 1
        %s235 = scalar_lea.sflag [#allocation3], %s234
        %s236 = sand.u32 %s31, 1
        %s237 = smul.addr %s236, 192
        %s238 = scalar_lea.vmem [#allocation2], %s237
        // Predicated region
        $region41: #{tpu_custom_call.1} parent=39 // pred_check
          %p239 = pneg %p44
        $region42: #{tpu_custom_call.1} parent=39 // pred_check_branch
          %241 = sbr.rel (%p239) target = $region44
        $region43: #{tpu_custom_call.1} parent=39 // pred_region
          %242 = dma.done %s235, 3072
        $region44: #{tpu_custom_call.1} parent=39 // pred_fallthru
          _
        // Predicated region
        $region45: #{tpu_custom_call.1} parent=39 // pred_check
          %p243 = pneg %p65
        $region46: #{tpu_custom_call.1} parent=39 // pred_check_branch
          %245 = sbr.rel (%p243) target = $region48
        $region47: #{tpu_custom_call.1} parent=39 // pred_region
          %246 = dma.done [#allocation6], 5120
        $region48: #{tpu_custom_call.1} parent=39 // pred_fallthru
          _
        // Predicated region
        $region49: #{tpu_custom_call.1} parent=39 // pred_check
          %p247 = pneg %p107
        $region50: #{tpu_custom_call.1} parent=39 // pred_check_branch
          %249 = sbr.rel (%p247) target = $region52
        $region51: #{tpu_custom_call.1} parent=39 // pred_region
          %250 = dma.done [#allocation6], 1024
        $region52: #{tpu_custom_call.1} parent=39 // pred_fallthru
          _
        %s251 = sand.u32 %s31, 1
        %s252 = scalar_lea.sflag [#allocation3], %s251
        %s253 = sand.u32 %s31, 1
        %s254 = smul.addr %s253, 192
        %s255 = scalar_lea.vmem [#allocation2], %s254
        %p256 = pneg %p44
        %p257 = pneg %p41
        %p258 = pneg %p65
        %p259 = pneg %p62
        %p260 = pneg %p86
        %p261 = pneg %p83
        %p262 = pneg %p107
        %p263 = pneg %p104
        %p264 = pneg %p128
        %p265 = pneg %p125
        %p266 = pneg %p154
        %p267 = pneg %p151
        %s268 = sand.u32 %s141, 1
        %s269 = scalar_lea.sflag [#allocation4], %s268
        %s270 = sand.u32 %s141, 1
        %s271 = smul.addr %s270, 16
        %s272 = scalar_lea.vmem [#allocation8], %s271
        %s273 = smul.u32 16, %s23
        %s274 = smul.u32 2, %s23
        %v276 = vld [vmem:[%s238] sm:$0xf]
        %v277 = vld [vmem:[%s238 + $0x4] sm:$0xf]
        %v278 = vld [vmem:[%s238 + $0xc] sm:$0xf]
        %v279 = vld [vmem:[%s238 + $0x10] sm:$0xf]
        %v280 = vld [vmem:[%s238 + $0x18] sm:$0xf]
        %v281 = vld [vmem:[%s238 + $0x1c] sm:$0xf]
        %v282 = vld [vmem:[%s238 + $0x24] sm:$0xf]
        %v283 = vld [vmem:[%s238 + $0x28] sm:$0xf]
        %v284 = vld [vmem:[%s238 + $0x30] sm:$0xf]
        %v285 = vld [vmem:[%s238 + $0x34] sm:$0xf]
        %v286 = vld [vmem:[%s238 + $0x3c] sm:$0xf]
        %v287 = vld [vmem:[%s238 + $0x40] sm:$0xf]
        %v288 = vld [vmem:[%s238 + $0x48] sm:$0xf]
        %v289 = vld [vmem:[%s238 + $0x4c] sm:$0xf]
        %v290 = vld [vmem:[%s238 + $0x54] sm:$0xf]
        %v291 = vld [vmem:[%s238 + $0x58] sm:$0xf]
        %v292 = vld [vmem:[%s238 + $0x60] sm:$0xf]
        %v293 = vld [vmem:[%s238 + $0x64] sm:$0xf]
        %v294 = vld [vmem:[%s238 + $0x6c] sm:$0xf]
        %v295 = vld [vmem:[%s238 + $0x70] sm:$0xf]
        %v296 = vld [vmem:[%s238 + $0x78] sm:$0xf]
        %v297 = vld [vmem:[%s238 + $0x7c] sm:$0xf]
        %v298 = vld [vmem:[%s238 + $0x84] sm:$0xf]
        %v299 = vld [vmem:[%s238 + $0x88] sm:$0xf]
        %v300 = vld [vmem:[%s238 + $0x90] sm:$0xf]
        %v301 = vld [vmem:[%s238 + $0x94] sm:$0xf]
        %v302 = vld [vmem:[%s238 + $0x9c] sm:$0xf]
        %v303 = vld [vmem:[%s238 + $0xa0] sm:$0xf]
        %v304 = vld [vmem:[%s238 + $0xa8] sm:$0xf]
        %v305 = vld [vmem:[%s238 + $0xac] sm:$0xf]
        %v306 = vld [vmem:[%s238 + $0xb4] sm:$0xf]
        %v307 = vld [vmem:[%s238 + $0xb8] sm:$0xf]
        %v308 = vld [vmem:[#allocation5] sm:$0xf]
        %v309 = vld [vmem:[#allocation5 + $0x4] sm:$0xf]
        %v310 = vld [vmem:[#allocation5 + $0x8] sm:$0xf]
        %v311 = vld [vmem:[#allocation5 + $0xc] sm:$0xf]
        %v312 = vld [vmem:[#allocation5 + $0x10] sm:$0xf]
        %v313 = vld [vmem:[#allocation5 + $0x14] sm:$0xf]
        %v314 = vld [vmem:[#allocation5 + $0x18] sm:$0xf]
        %v315 = vld [vmem:[#allocation5 + $0x1c] sm:$0xf]
        %v316 = vld [vmem:[#allocation5 + $0x20] sm:$0xf]
        %v317 = vld [vmem:[#allocation5 + $0x24] sm:$0xf]
        %v318 = vld [vmem:[#allocation5 + $0x28] sm:$0xf]
        %v319 = vld [vmem:[#allocation5 + $0x2c] sm:$0xf]
        %v320 = vld [vmem:[#allocation5 + $0x30] sm:$0xf]
        %v321 = vld [vmem:[#allocation5 + $0x34] sm:$0xf]
        %v322 = vld [vmem:[#allocation5 + $0x38] sm:$0xf]
        %v323 = vld [vmem:[#allocation5 + $0x3c] sm:$0xf]
        %v324 = vld [vmem:[%s238] sm:$0xf]
        %v325 = vld [vmem:[%s238 + $0x4] sm:$0xf]
        %v326 = vld [vmem:[%s238 + $0x8] sm:$0x1]
        %v327 = vld [vmem:[%s238 + $0xc] sm:$0xf]
        %v328 = vld [vmem:[%s238 + $0x10] sm:$0xf]
        %v329 = vld [vmem:[%s238 + $0x14] sm:$0x1]
        %v330 = vld [vmem:[%s238 + $0x18] sm:$0xf]
        %v331 = vld [vmem:[%s238 + $0x1c] sm:$0xf]
        %v332 = vld [vmem:[%s238 + $0x20] sm:$0x1]
        %v333 = vld [vmem:[%s238 + $0x24] sm:$0xf]
        %v334 = vld [vmem:[%s238 + $0x28] sm:$0xf]
        %v335 = vld [vmem:[%s238 + $0x2c] sm:$0x1]
        %v336 = vld [vmem:[%s238 + $0x30] sm:$0xf]
        %v337 = vld [vmem:[%s238 + $0x34] sm:$0xf]
        %v338 = vld [vmem:[%s238 + $0x38] sm:$0x1]
        %v339 = vld [vmem:[%s238 + $0x3c] sm:$0xf]
        %v340 = vld [vmem:[%s238 + $0x40] sm:$0xf]
        %v341 = vld [vmem:[%s238 + $0x44] sm:$0x1]
        %v342 = vld [vmem:[%s238 + $0x48] sm:$0xf]
        %v343 = vld [vmem:[%s238 + $0x4c] sm:$0xf]
        %v344 = vld [vmem:[%s238 + $0x50] sm:$0x1]
        %v345 = vld [vmem:[%s238 + $0x54] sm:$0xf]
        %v346 = vld [vmem:[%s238 + $0x58] sm:$0xf]
        %v347 = vld [vmem:[%s238 + $0x5c] sm:$0x1]
        %v348 = vld [vmem:[%s238 + $0x60] sm:$0xf]
        %v349 = vld [vmem:[%s238 + $0x64] sm:$0xf]
        %v350 = vld [vmem:[%s238 + $0x68] sm:$0x1]
        %v351 = vld [vmem:[%s238 + $0x6c] sm:$0xf]
        %v352 = vld [vmem:[%s238 + $0x70] sm:$0xf]
        %v353 = vld [vmem:[%s238 + $0x74] sm:$0x1]
        %v354 = vld [vmem:[%s238 + $0x78] sm:$0xf]
        %v355 = vld [vmem:[%s238 + $0x7c] sm:$0xf]
        %v356 = vld [vmem:[%s238 + $0x80] sm:$0x1]
        %v357 = vld [vmem:[%s238 + $0x84] sm:$0xf]
        %v358 = vld [vmem:[%s238 + $0x88] sm:$0xf]
        %v359 = vld [vmem:[%s238 + $0x8c] sm:$0x1]
        %v360 = vld [vmem:[%s238 + $0x90] sm:$0xf]
        %v361 = vld [vmem:[%s238 + $0x94] sm:$0xf]
        %v362 = vld [vmem:[%s238 + $0x98] sm:$0x1]
        %v363 = vld [vmem:[%s238 + $0x9c] sm:$0xf]
        %v364 = vld [vmem:[%s238 + $0xa0] sm:$0xf]
        %v365 = vld [vmem:[%s238 + $0xa4] sm:$0x1]
        %v366 = vld [vmem:[%s238 + $0xa8] sm:$0xf]
        %v367 = vld [vmem:[%s238 + $0xac] sm:$0xf]
        %v368 = vld [vmem:[%s238 + $0xb0] sm:$0x1]
        %v369 = vld [vmem:[%s238 + $0xb4] sm:$0xf]
        %v370 = vld [vmem:[%s238 + $0xb8] sm:$0xf]
        %v371 = vld [vmem:[%s238 + $0xbc] sm:$0x1]
        %vm372 = vsmask.f32 3328
        %vm373 = vsmask.f32 7440
        %vm374 = vmor %vm372, %vm373
        %v376 = vshrl.u32 %v324, 16
        %v378 = vrot.slane %v376, 4
        %v379 = vshll.u32 %v324, 16
        %v381 = vrot.slane %v379, 5
        %v382 = vor.u32 %v378, %v381
        %v383 = vrot.slane %v382, 4
        %v385 = vshll.u32 %v325, 16
        %v387 = vrot.slane %v385, 5
        %v388 = vsel %vm374, %v383, %v387
        %v389 = vshrl.u32 %v325, 16
        %v391 = vrot.slane %v389, 4
        %v392 = vor.u32 %v391, %v387
        %v393 = vrot.slane %v392, 4
        %v395 = vshll.u32 %v326, 16
        %v397 = vrot.slane %v395, 5
        %v398 = vsel %vm374, %v393, %v397
        %v400 = vshrl.u32 %v327, 16
        %v402 = vrot.slane %v400, 4
        %v403 = vshll.u32 %v327, 16
        %v405 = vrot.slane %v403, 5
        %v406 = vor.u32 %v402, %v405
        %v407 = vrot.slane %v406, 4
        %v409 = vshll.u32 %v328, 16
        %v411 = vrot.slane %v409, 5
        %v412 = vsel %vm374, %v407, %v411
        %v413 = vshrl.u32 %v328, 16
        %v415 = vrot.slane %v413, 4
        %v416 = vor.u32 %v415, %v411
        %v417 = vrot.slane %v416, 4
        %v419 = vshll.u32 %v329, 16
        %v421 = vrot.slane %v419, 5
        %v422 = vsel %vm374, %v417, %v421
        %v424 = vshrl.u32 %v330, 16
        %v426 = vrot.slane %v424, 4
        %v427 = vshll.u32 %v330, 16
        %v429 = vrot.slane %v427, 5
        %v430 = vor.u32 %v426, %v429
        %v431 = vrot.slane %v430, 4
        %v433 = vshll.u32 %v331, 16
        %v435 = vrot.slane %v433, 5
        %v436 = vsel %vm374, %v431, %v435
        %v437 = vshrl.u32 %v331, 16
        %v439 = vrot.slane %v437, 4
        %v440 = vor.u32 %v439, %v435
        %v441 = vrot.slane %v440, 4
        %v443 = vshll.u32 %v332, 16
        %v445 = vrot.slane %v443, 5
        %v446 = vsel %vm374, %v441, %v445
        %v448 = vshrl.u32 %v333, 16
        %v450 = vrot.slane %v448, 4
        %v451 = vshll.u32 %v333, 16
        %v453 = vrot.slane %v451, 5
        %v454 = vor.u32 %v450, %v453
        %v455 = vrot.slane %v454, 4
        %v457 = vshll.u32 %v334, 16
        %v459 = vrot.slane %v457, 5
        %v460 = vsel %vm374, %v455, %v459
        %v461 = vshrl.u32 %v334, 16
        %v463 = vrot.slane %v461, 4
        %v464 = vor.u32 %v463, %v459
        %v465 = vrot.slane %v464, 4
        %v467 = vshll.u32 %v335, 16
        %v469 = vrot.slane %v467, 5
        %v470 = vsel %vm374, %v465, %v469
        %v472 = vshrl.u32 %v336, 16
        %v474 = vrot.slane %v472, 4
        %v475 = vshll.u32 %v336, 16
        %v477 = vrot.slane %v475, 5
        %v478 = vor.u32 %v474, %v477
        %v479 = vrot.slane %v478, 4
        %v481 = vshll.u32 %v337, 16
        %v483 = vrot.slane %v481, 5
        %v484 = vsel %vm374, %v479, %v483
        %v485 = vshrl.u32 %v337, 16
        %v487 = vrot.slane %v485, 4
        %v488 = vor.u32 %v487, %v483
        %v489 = vrot.slane %v488, 4
        %v491 = vshll.u32 %v338, 16
        %v493 = vrot.slane %v491, 5
        %v494 = vsel %vm374, %v489, %v493
        %v496 = vshrl.u32 %v339, 16
        %v498 = vrot.slane %v496, 4
        %v499 = vshll.u32 %v339, 16
        %v501 = vrot.slane %v499, 5
        %v502 = vor.u32 %v498, %v501
        %v503 = vrot.slane %v502, 4
        %v505 = vshll.u32 %v340, 16
        %v507 = vrot.slane %v505, 5
        %v508 = vsel %vm374, %v503, %v507
        %v509 = vshrl.u32 %v340, 16
        %v511 = vrot.slane %v509, 4
        %v512 = vor.u32 %v511, %v507
        %v513 = vrot.slane %v512, 4
        %v515 = vshll.u32 %v341, 16
        %v517 = vrot.slane %v515, 5
        %v518 = vsel %vm374, %v513, %v517
        %v520 = vshrl.u32 %v342, 16
        %v522 = vrot.slane %v520, 4
        %v523 = vshll.u32 %v342, 16
        %v525 = vrot.slane %v523, 5
        %v526 = vor.u32 %v522, %v525
        %v527 = vrot.slane %v526, 4
        %v529 = vshll.u32 %v343, 16
        %v531 = vrot.slane %v529, 5
        %v532 = vsel %vm374, %v527, %v531
        %v533 = vshrl.u32 %v343, 16
        %v535 = vrot.slane %v533, 4
        %v536 = vor.u32 %v535, %v531
        %v537 = vrot.slane %v536, 4
        %v539 = vshll.u32 %v344, 16
        %v541 = vrot.slane %v539, 5
        %v542 = vsel %vm374, %v537, %v541
        %v544 = vshrl.u32 %v345, 16
        %v546 = vrot.slane %v544, 4
        %v547 = vshll.u32 %v345, 16
        %v549 = vrot.slane %v547, 5
        %v550 = vor.u32 %v546, %v549
        %v551 = vrot.slane %v550, 4
        %v553 = vshll.u32 %v346, 16
        %v555 = vrot.slane %v553, 5
        %v556 = vsel %vm374, %v551, %v555
        %v557 = vshrl.u32 %v346, 16
        %v559 = vrot.slane %v557, 4
        %v560 = vor.u32 %v559, %v555
        %v561 = vrot.slane %v560, 4
        %v563 = vshll.u32 %v347, 16
        %v565 = vrot.slane %v563, 5
        %v566 = vsel %vm374, %v561, %v565
        %v568 = vshrl.u32 %v348, 16
        %v570 = vrot.slane %v568, 4
        %v571 = vshll.u32 %v348, 16
        %v573 = vrot.slane %v571, 5
        %v574 = vor.u32 %v570, %v573
        %v575 = vrot.slane %v574, 4
        %v577 = vshll.u32 %v349, 16
        %v579 = vrot.slane %v577, 5
        %v580 = vsel %vm374, %v575, %v579
        %v581 = vshrl.u32 %v349, 16
        %v583 = vrot.slane %v581, 4
        %v584 = vor.u32 %v583, %v579
        %v585 = vrot.slane %v584, 4
        %v587 = vshll.u32 %v350, 16
        %v589 = vrot.slane %v587, 5
        %v590 = vsel %vm374, %v585, %v589
        %v592 = vshrl.u32 %v351, 16
        %v594 = vrot.slane %v592, 4
        %v595 = vshll.u32 %v351, 16
        %v597 = vrot.slane %v595, 5
        %v598 = vor.u32 %v594, %v597
        %v599 = vrot.slane %v598, 4
        %v601 = vshll.u32 %v352, 16
        %v603 = vrot.slane %v601, 5
        %v604 = vsel %vm374, %v599, %v603
        %v605 = vshrl.u32 %v352, 16
        %v607 = vrot.slane %v605, 4
        %v608 = vor.u32 %v607, %v603
        %v609 = vrot.slane %v608, 4
        %v611 = vshll.u32 %v353, 16
        %v613 = vrot.slane %v611, 5
        %v614 = vsel %vm374, %v609, %v613
        %v616 = vshrl.u32 %v354, 16
        %v618 = vrot.slane %v616, 4
        %v619 = vshll.u32 %v354, 16
        %v621 = vrot.slane %v619, 5
        %v622 = vor.u32 %v618, %v621
        %v623 = vrot.slane %v622, 4
        %v625 = vshll.u32 %v355, 16
        %v627 = vrot.slane %v625, 5
        %v628 = vsel %vm374, %v623, %v627
        %v629 = vshrl.u32 %v355, 16
        %v631 = vrot.slane %v629, 4
        %v632 = vor.u32 %v631, %v627
        %v633 = vrot.slane %v632, 4
        %v635 = vshll.u32 %v356, 16
        %v637 = vrot.slane %v635, 5
        %v638 = vsel %vm374, %v633, %v637
        %v640 = vshrl.u32 %v357, 16
        %v642 = vrot.slane %v640, 4
        %v643 = vshll.u32 %v357, 16
        %v645 = vrot.slane %v643, 5
        %v646 = vor.u32 %v642, %v645
        %v647 = vrot.slane %v646, 4
        %v649 = vshll.u32 %v358, 16
        %v651 = vrot.slane %v649, 5
        %v652 = vsel %vm374, %v647, %v651
        %v653 = vshrl.u32 %v358, 16
        %v655 = vrot.slane %v653, 4
        %v656 = vor.u32 %v655, %v651
        %v657 = vrot.slane %v656, 4
        %v659 = vshll.u32 %v359, 16
        %v661 = vrot.slane %v659, 5
        %v662 = vsel %vm374, %v657, %v661
        %v664 = vshrl.u32 %v360, 16
        %v666 = vrot.slane %v664, 4
        %v667 = vshll.u32 %v360, 16
        %v669 = vrot.slane %v667, 5
        %v670 = vor.u32 %v666, %v669
        %v671 = vrot.slane %v670, 4
        %v673 = vshll.u32 %v361, 16
        %v675 = vrot.slane %v673, 5
        %v676 = vsel %vm374, %v671, %v675
        %v677 = vshrl.u32 %v361, 16
        %v679 = vrot.slane %v677, 4
        %v680 = vor.u32 %v679, %v675
        %v681 = vrot.slane %v680, 4
        %v683 = vshll.u32 %v362, 16
        %v685 = vrot.slane %v683, 5
        %v686 = vsel %vm374, %v681, %v685
        %v688 = vshrl.u32 %v363, 16
        %v690 = vrot.slane %v688, 4
        %v691 = vshll.u32 %v363, 16
        %v693 = vrot.slane %v691, 5
        %v694 = vor.u32 %v690, %v693
        %v695 = vrot.slane %v694, 4
        %v697 = vshll.u32 %v364, 16
        %v699 = vrot.slane %v697, 5
        %v700 = vsel %vm374, %v695, %v699
        %v701 = vshrl.u32 %v364, 16
        %v703 = vrot.slane %v701, 4
        %v704 = vor.u32 %v703, %v699
        %v705 = vrot.slane %v704, 4
        %v707 = vshll.u32 %v365, 16
        %v709 = vrot.slane %v707, 5
        %v710 = vsel %vm374, %v705, %v709
        %v712 = vshrl.u32 %v366, 16
        %v714 = vrot.slane %v712, 4
        %v715 = vshll.u32 %v366, 16
        %v717 = vrot.slane %v715, 5
        %v718 = vor.u32 %v714, %v717
        %v719 = vrot.slane %v718, 4
        %v721 = vshll.u32 %v367, 16
        %v723 = vrot.slane %v721, 5
        %v724 = vsel %vm374, %v719, %v723
        %v725 = vshrl.u32 %v367, 16
        %v727 = vrot.slane %v725, 4
        %v728 = vor.u32 %v727, %v723
        %v729 = vrot.slane %v728, 4
        %v731 = vshll.u32 %v368, 16
        %v733 = vrot.slane %v731, 5
        %v734 = vsel %vm374, %v729, %v733
        %v736 = vshrl.u32 %v369, 16
        %v738 = vrot.slane %v736, 4
        %v739 = vshll.u32 %v369, 16
        %v741 = vrot.slane %v739, 5
        %v742 = vor.u32 %v738, %v741
        %v743 = vrot.slane %v742, 4
        %v745 = vshll.u32 %v370, 16
        %v747 = vrot.slane %v745, 5
        %v748 = vsel %vm374, %v743, %v747
        %v749 = vshrl.u32 %v370, 16
        %v751 = vrot.slane %v749, 4
        %v752 = vor.u32 %v751, %v747
        %v753 = vrot.slane %v752, 4
        %v755 = vshll.u32 %v371, 16
        %v757 = vrot.slane %v755, 5
        %v758 = vsel %vm374, %v753, %v757
        %s759 = scalar_lea.vmem [#allocation5], 64
        %v760 = vld [vmem:[%s759] sm:$0xf]
        %v761 = vld [vmem:[%s759 + $0x4] sm:$0xf]
        %v762 = vld [vmem:[%s759 + $0x8] sm:$0xf]
        %v763 = vld [vmem:[%s759 + $0xc] sm:$0xf]
        %v764 = vld [vmem:[%s759 + $0x10] sm:$0xf]
        %v765 = vld [vmem:[%s759 + $0x14] sm:$0xf]
        %v766 = vld [vmem:[%s759 + $0x18] sm:$0xf]
        %v767 = vld [vmem:[%s759 + $0x1c] sm:$0xf]
        %v768 = vld [vmem:[%s759 + $0x20] sm:$0xf]
        %v769 = vld [vmem:[%s759 + $0x24] sm:$0xf]
        %v770 = vld [vmem:[%s759 + $0x28] sm:$0xf]
        %v771 = vld [vmem:[%s759 + $0x2c] sm:$0xf]
        %v772 = vld [vmem:[%s759 + $0x30] sm:$0xf]
        %v773 = vld [vmem:[%s759 + $0x34] sm:$0xf]
        %v774 = vld [vmem:[%s759 + $0x38] sm:$0xf]
        %v775 = vld [vmem:[%s759 + $0x3c] sm:$0xf]
        %v776 = vunpack.c.l.b16 %v388
        %v777 = vunpack.c.l.b16 %v398
        %v778 = vunpack.c.l.b16 %v412
        %v779 = vunpack.c.l.b16 %v422
        %v780 = vunpack.c.l.b16 %v436
        %v781 = vunpack.c.l.b16 %v446
        %v782 = vunpack.c.l.b16 %v460
        %v783 = vunpack.c.l.b16 %v470
        %v784 = vunpack.c.l.b16 %v484
        %v785 = vunpack.c.l.b16 %v494
        %v786 = vunpack.c.l.b16 %v508
        %v787 = vunpack.c.l.b16 %v518
        %v788 = vunpack.c.l.b16 %v532
        %v789 = vunpack.c.l.b16 %v542
        %v790 = vunpack.c.l.b16 %v556
        %v791 = vunpack.c.l.b16 %v566
        %v792 = vunpack.c.l.b16 %v580
        %v793 = vunpack.c.l.b16 %v590
        %v794 = vunpack.c.l.b16 %v604
        %v795 = vunpack.c.l.b16 %v614
        %v796 = vunpack.c.l.b16 %v628
        %v797 = vunpack.c.l.b16 %v638
        %v798 = vunpack.c.l.b16 %v652
        %v799 = vunpack.c.l.b16 %v662
        %v800 = vunpack.c.l.b16 %v676
        %v801 = vunpack.c.l.b16 %v686
        %v802 = vunpack.c.l.b16 %v700
        %v803 = vunpack.c.l.b16 %v710
        %v804 = vunpack.c.l.b16 %v724
        %v805 = vunpack.c.l.b16 %v734
        %v806 = vunpack.c.l.b16 %v748
        %v807 = vunpack.c.l.b16 %v758
        %v808 = vpack.c.b16 %v777, %v776
        %v809 = vpack.c.b16 %v779, %v778
        %v810 = vpack.c.b16 %v781, %v780
        %v811 = vpack.c.b16 %v783, %v782
        %v812 = vpack.c.b16 %v785, %v784
        %v813 = vpack.c.b16 %v787, %v786
        %v814 = vpack.c.b16 %v789, %v788
        %v815 = vpack.c.b16 %v791, %v790
        %v816 = vpack.c.b16 %v793, %v792
        %v817 = vpack.c.b16 %v795, %v794
        %v818 = vpack.c.b16 %v797, %v796
        %v819 = vpack.c.b16 %v799, %v798
        %v820 = vpack.c.b16 %v801, %v800
        %v821 = vpack.c.b16 %v803, %v802
        %v822 = vpack.c.b16 %v805, %v804
        %v823 = vpack.c.b16 %v807, %v806
        %v856 = vunpack.c.l.b16 %v760
        %v857 = vunpack.c.l.b16 %v761
        %v858 = vunpack.c.l.b16 %v762
        %v859 = vunpack.c.l.b16 %v763
        %v860 = vunpack.c.l.b16 %v764
        %v861 = vunpack.c.l.b16 %v765
        %v862 = vunpack.c.l.b16 %v766
        %v863 = vunpack.c.l.b16 %v767
        %v864 = vunpack.c.l.b16 %v768
        %v865 = vunpack.c.l.b16 %v769
        %v866 = vunpack.c.l.b16 %v770
        %v867 = vunpack.c.l.b16 %v771
        %v868 = vunpack.c.l.b16 %v772
        %v869 = vunpack.c.l.b16 %v773
        %v870 = vunpack.c.l.b16 %v774
        %v871 = vunpack.c.l.b16 %v775
        %v872 = vpack.c.b16 %v857, %v856
        %v873 = vpack.c.b16 %v859, %v858
        %v874 = vpack.c.b16 %v861, %v860
        %v875 = vpack.c.b16 %v863, %v862
        %v876 = vpack.c.b16 %v865, %v864
        %v877 = vpack.c.b16 %v867, %v866
        %v878 = vpack.c.b16 %v869, %v868
        %v879 = vpack.c.b16 %v871, %v870
        %888 = vmatprep.subr.bf16.mxu0 0
        %889 = vmatpush1.bf16.msra.mxu0 %v879
        %890 = vmatprep.subr.bf16.mxu0 0
        %891 = vmatpush1.bf16.msra.mxu0 %v878
        %892 = vmatprep.subr.bf16.mxu0 0
        %893 = vmatpush1.bf16.msra.mxu0 %v877
        %894 = vmatprep.subr.bf16.mxu0 0
        %895 = vmatpush1.bf16.msra.mxu0 %v876
        %896 = vmatprep.subr.bf16.mxu0 0
        %897 = vmatpush1.bf16.msra.mxu0 %v875
        %898 = vmatprep.subr.bf16.mxu0 0
        %899 = vmatpush1.bf16.msra.mxu0 %v874
        %900 = vmatprep.subr.bf16.mxu0 0
        %901 = vmatpush1.bf16.msra.mxu0 %v873
        %902 = vmatprep.subr.bf16.mxu0 0
        %903 = vmatpush1.bf16.msra.mxu0 %v872
        %904 = vmatprep.subr.bf16.mxu0 0
        %905 = vmatpush2.bf16.msra.mxu0 0
        %906 = vmatprep.subr.bf16.mxu0 0
        %907 = vmatpush2.bf16.msra.mxu0 0
        %908 = vmatprep.subr.bf16.mxu0 0
        %909 = vmatpush2.bf16.msra.mxu0 0
        %910 = vmatprep.subr.bf16.mxu0 0
        %911 = vmatpush2.bf16.msra.mxu0 0
        %912 = vmatprep.subr.bf16.mxu0 0
        %913 = vmatpush2.bf16.msra.mxu0 0
        %914 = vmatprep.subr.bf16.mxu0 0
        %915 = vmatpush2.bf16.msra.mxu0 0
        %916 = vmatprep.subr.bf16.mxu0 0
        %917 = vmatpush2.bf16.msra.mxu0 0
        %918 = vmatprep.subr.bf16.mxu0 0
        %919 = vmatpush2.bf16.msra.mxu0 0
        %920 = vmatprep.mubr.bf16.mxu0 0
        %921 = vmatmul.mubr.bf16.gmra.mxu0 %v808
        %v922 = vpop.f32.mrf.mxu0
        %v923 = vadd.f32 0.0, %v922
        %v924 = vpop.f32.mrf.mxu0
        %v925 = vpop.f32.mrf.mxu0
        %v926 = vadd.f32 0.0, %v925
        %v927 = vpop.f32.mrf.mxu0
        %928 = vmatprep.mubr.bf16.mxu0 0
        %929 = vmatmul.mubr.bf16.gmra.mxu0 %v809
        %v930 = vpop.f32.mrf.mxu0
        %v931 = vadd.f32 0.0, %v930
        %v932 = vpop.f32.mrf.mxu0
        %v933 = vpop.f32.mrf.mxu0
        %v934 = vadd.f32 0.0, %v933
        %v935 = vpop.f32.mrf.mxu0
        %936 = vmatprep.mubr.bf16.mxu0 0
        %937 = vmatmul.mubr.bf16.gmra.mxu0 %v810
        %v938 = vpop.f32.mrf.mxu0
        %v939 = vadd.f32 0.0, %v938
        %v940 = vpop.f32.mrf.mxu0
        %v941 = vpop.f32.mrf.mxu0
        %v942 = vadd.f32 0.0, %v941
        %v943 = vpop.f32.mrf.mxu0
        %944 = vmatprep.mubr.bf16.mxu0 0
        %945 = vmatmul.mubr.bf16.gmra.mxu0 %v811
        %v946 = vpop.f32.mrf.mxu0
        %v947 = vadd.f32 0.0, %v946
        %v948 = vpop.f32.mrf.mxu0
        %v949 = vpop.f32.mrf.mxu0
        %v950 = vadd.f32 0.0, %v949
        %v951 = vpop.f32.mrf.mxu0
        %952 = vmatprep.mubr.bf16.mxu0 0
        %953 = vmatmul.mubr.bf16.gmra.mxu0 %v812
        %v954 = vpop.f32.mrf.mxu0
        %v955 = vadd.f32 0.0, %v954
        %v956 = vpop.f32.mrf.mxu0
        %v957 = vpop.f32.mrf.mxu0
        %v958 = vadd.f32 0.0, %v957
        %v959 = vpop.f32.mrf.mxu0
        %960 = vmatprep.mubr.bf16.mxu0 0
        %961 = vmatmul.mubr.bf16.gmra.mxu0 %v813
        %v962 = vpop.f32.mrf.mxu0
        %v963 = vadd.f32 0.0, %v962
        %v964 = vpop.f32.mrf.mxu0
        %v965 = vpop.f32.mrf.mxu0
        %v966 = vadd.f32 0.0, %v965
        %v967 = vpop.f32.mrf.mxu0
        %968 = vmatprep.mubr.bf16.mxu0 0
        %969 = vmatmul.mubr.bf16.gmra.mxu0 %v814
        %v970 = vpop.f32.mrf.mxu0
        %v971 = vadd.f32 0.0, %v970
        %v972 = vpop.f32.mrf.mxu0
        %v973 = vpop.f32.mrf.mxu0
        %v974 = vadd.f32 0.0, %v973
        %v975 = vpop.f32.mrf.mxu0
        %976 = vmatprep.mubr.bf16.mxu0 0
        %977 = vmatmul.mubr.bf16.gmra.mxu0 %v815
        %v978 = vpop.f32.mrf.mxu0
        %v979 = vadd.f32 0.0, %v978
        %v980 = vpop.f32.mrf.mxu0
        %v981 = vpop.f32.mrf.mxu0
        %v982 = vadd.f32 0.0, %v981
        %v983 = vpop.f32.mrf.mxu0
        %984 = vmatprep.mubr.bf16.mxu0 0
        %985 = vmatmul.mubr.bf16.gmra.mxu0 %v816
        %v986 = vpop.f32.mrf.mxu0
        %v987 = vadd.f32 0.0, %v986
        %v988 = vpop.f32.mrf.mxu0
        %v989 = vpop.f32.mrf.mxu0
        %v990 = vadd.f32 0.0, %v989
        %v991 = vpop.f32.mrf.mxu0
        %992 = vmatprep.mubr.bf16.mxu0 0
        %993 = vmatmul.mubr.bf16.gmra.mxu0 %v817
        %v994 = vpop.f32.mrf.mxu0
        %v995 = vadd.f32 0.0, %v994
        %v996 = vpop.f32.mrf.mxu0
        %v997 = vpop.f32.mrf.mxu0
        %v998 = vadd.f32 0.0, %v997
        %v999 = vpop.f32.mrf.mxu0
        %1000 = vmatprep.mubr.bf16.mxu0 0
        %1001 = vmatmul.mubr.bf16.gmra.mxu0 %v818
        %v1002 = vpop.f32.mrf.mxu0
        %v1003 = vadd.f32 0.0, %v1002
        %v1004 = vpop.f32.mrf.mxu0
        %v1005 = vpop.f32.mrf.mxu0
        %v1006 = vadd.f32 0.0, %v1005
        %v1007 = vpop.f32.mrf.mxu0
        %1008 = vmatprep.mubr.bf16.mxu0 0
        %1009 = vmatmul.mubr.bf16.gmra.mxu0 %v819
        %v1010 = vpop.f32.mrf.mxu0
        %v1011 = vadd.f32 0.0, %v1010
        %v1012 = vpop.f32.mrf.mxu0
        %v1013 = vpop.f32.mrf.mxu0
        %v1014 = vadd.f32 0.0, %v1013
        %v1015 = vpop.f32.mrf.mxu0
        %1016 = vmatprep.mubr.bf16.mxu0 0
        %1017 = vmatmul.mubr.bf16.gmra.mxu0 %v820
        %v1018 = vpop.f32.mrf.mxu0
        %v1019 = vadd.f32 0.0, %v1018
        %v1020 = vpop.f32.mrf.mxu0
        %v1021 = vpop.f32.mrf.mxu0
        %v1022 = vadd.f32 0.0, %v1021
        %v1023 = vpop.f32.mrf.mxu0
        %1024 = vmatprep.mubr.bf16.mxu0 0
        %1025 = vmatmul.mubr.bf16.gmra.mxu0 %v821
        %v1026 = vpop.f32.mrf.mxu0
        %v1027 = vadd.f32 0.0, %v1026
        %v1028 = vpop.f32.mrf.mxu0
        %v1029 = vpop.f32.mrf.mxu0
        %v1030 = vadd.f32 0.0, %v1029
        %v1031 = vpop.f32.mrf.mxu0
        %1032 = vmatprep.mubr.bf16.mxu0 0
        %1033 = vmatmul.mubr.bf16.gmra.mxu0 %v822
        %v1034 = vpop.f32.mrf.mxu0
        %v1035 = vadd.f32 0.0, %v1034
        %v1036 = vpop.f32.mrf.mxu0
        %v1037 = vpop.f32.mrf.mxu0
        %v1038 = vadd.f32 0.0, %v1037
        %v1039 = vpop.f32.mrf.mxu0
        %1040 = vmatprep.mubr.bf16.mxu0 0
        %1041 = vmatmul.mubr.bf16.gmra.mxu0 %v823
        %v1042 = vpop.f32.mrf.mxu0
        %v1043 = vadd.f32 0.0, %v1042
        %v1044 = vpop.f32.mrf.mxu0
        %v1045 = vpop.f32.mrf.mxu0
        %v1046 = vadd.f32 0.0, %v1045
        %v1047 = vpop.f32.mrf.mxu0
        %1048 = vdwg.mxu0
        %v1081 = vunpack.c.l.b16 %v276
        %v1082 = vunpack.c.l.b16 %v277
        %v1083 = vunpack.c.l.b16 %v278
        %v1084 = vunpack.c.l.b16 %v279
        %v1085 = vunpack.c.l.b16 %v280
        %v1086 = vunpack.c.l.b16 %v281
        %v1087 = vunpack.c.l.b16 %v282
        %v1088 = vunpack.c.l.b16 %v283
        %v1089 = vunpack.c.l.b16 %v284
        %v1090 = vunpack.c.l.b16 %v285
        %v1091 = vunpack.c.l.b16 %v286
        %v1092 = vunpack.c.l.b16 %v287
        %v1093 = vunpack.c.l.b16 %v288
        %v1094 = vunpack.c.l.b16 %v289
        %v1095 = vunpack.c.l.b16 %v290
        %v1096 = vunpack.c.l.b16 %v291
        %v1097 = vunpack.c.l.b16 %v292
        %v1098 = vunpack.c.l.b16 %v293
        %v1099 = vunpack.c.l.b16 %v294
        %v1100 = vunpack.c.l.b16 %v295
        %v1101 = vunpack.c.l.b16 %v296
        %v1102 = vunpack.c.l.b16 %v297
        %v1103 = vunpack.c.l.b16 %v298
        %v1104 = vunpack.c.l.b16 %v299
        %v1105 = vunpack.c.l.b16 %v300
        %v1106 = vunpack.c.l.b16 %v301
        %v1107 = vunpack.c.l.b16 %v302
        %v1108 = vunpack.c.l.b16 %v303
        %v1109 = vunpack.c.l.b16 %v304
        %v1110 = vunpack.c.l.b16 %v305
        %v1111 = vunpack.c.l.b16 %v306
        %v1112 = vunpack.c.l.b16 %v307
        %v1113 = vpack.c.b16 %v1082, %v1081
        %v1114 = vpack.c.b16 %v1084, %v1083
        %v1115 = vpack.c.b16 %v1086, %v1085
        %v1116 = vpack.c.b16 %v1088, %v1087
        %v1117 = vpack.c.b16 %v1090, %v1089
        %v1118 = vpack.c.b16 %v1092, %v1091
        %v1119 = vpack.c.b16 %v1094, %v1093
        %v1120 = vpack.c.b16 %v1096, %v1095
        %v1121 = vpack.c.b16 %v1098, %v1097
        %v1122 = vpack.c.b16 %v1100, %v1099
        %v1123 = vpack.c.b16 %v1102, %v1101
        %v1124 = vpack.c.b16 %v1104, %v1103
        %v1125 = vpack.c.b16 %v1106, %v1105
        %v1126 = vpack.c.b16 %v1108, %v1107
        %v1127 = vpack.c.b16 %v1110, %v1109
        %v1128 = vpack.c.b16 %v1112, %v1111
        %v1161 = vunpack.c.l.b16 %v308
        %v1162 = vunpack.c.l.b16 %v309
        %v1163 = vunpack.c.l.b16 %v310
        %v1164 = vunpack.c.l.b16 %v311
        %v1165 = vunpack.c.l.b16 %v312
        %v1166 = vunpack.c.l.b16 %v313
        %v1167 = vunpack.c.l.b16 %v314
        %v1168 = vunpack.c.l.b16 %v315
        %v1169 = vunpack.c.l.b16 %v316
        %v1170 = vunpack.c.l.b16 %v317
        %v1171 = vunpack.c.l.b16 %v318
        %v1172 = vunpack.c.l.b16 %v319
        %v1173 = vunpack.c.l.b16 %v320
        %v1174 = vunpack.c.l.b16 %v321
        %v1175 = vunpack.c.l.b16 %v322
        %v1176 = vunpack.c.l.b16 %v323
        %v1177 = vpack.c.b16 %v1162, %v1161
        %v1178 = vpack.c.b16 %v1164, %v1163
        %v1179 = vpack.c.b16 %v1166, %v1165
        %v1180 = vpack.c.b16 %v1168, %v1167
        %v1181 = vpack.c.b16 %v1170, %v1169
        %v1182 = vpack.c.b16 %v1172, %v1171
        %v1183 = vpack.c.b16 %v1174, %v1173
        %v1184 = vpack.c.b16 %v1176, %v1175
        %1193 = vmatprep.subr.bf16.mxu0 0
        %1194 = vmatpush1.bf16.msra.mxu0 %v1184
        %1195 = vmatprep.subr.bf16.mxu0 0
        %1196 = vmatpush1.bf16.msra.mxu0 %v1183
        %1197 = vmatprep.subr.bf16.mxu0 0
        %1198 = vmatpush1.bf16.msra.mxu0 %v1182
        %1199 = vmatprep.subr.bf16.mxu0 0
        %1200 = vmatpush1.bf16.msra.mxu0 %v1181
        %1201 = vmatprep.subr.bf16.mxu0 0
        %1202 = vmatpush1.bf16.msra.mxu0 %v1180
        %1203 = vmatprep.subr.bf16.mxu0 0
        %1204 = vmatpush1.bf16.msra.mxu0 %v1179
        %1205 = vmatprep.subr.bf16.mxu0 0
        %1206 = vmatpush1.bf16.msra.mxu0 %v1178
        %1207 = vmatprep.subr.bf16.mxu0 0
        %1208 = vmatpush1.bf16.msra.mxu0 %v1177
        %1209 = vmatprep.subr.bf16.mxu0 0
        %1210 = vmatpush2.bf16.msra.mxu0 0
        %1211 = vmatprep.subr.bf16.mxu0 0
        %1212 = vmatpush2.bf16.msra.mxu0 0
        %1213 = vmatprep.subr.bf16.mxu0 0
        %1214 = vmatpush2.bf16.msra.mxu0 0
        %1215 = vmatprep.subr.bf16.mxu0 0
        %1216 = vmatpush2.bf16.msra.mxu0 0
        %1217 = vmatprep.subr.bf16.mxu0 0
        %1218 = vmatpush2.bf16.msra.mxu0 0
        %1219 = vmatprep.subr.bf16.mxu0 0
        %1220 = vmatpush2.bf16.msra.mxu0 0
        %1221 = vmatprep.subr.bf16.mxu0 0
        %1222 = vmatpush2.bf16.msra.mxu0 0
        %1223 = vmatprep.subr.bf16.mxu0 0
        %1224 = vmatpush2.bf16.msra.mxu0 0
        %1225 = vmatprep.mubr.bf16.mxu0 0
        %1226 = vmatmul.mubr.bf16.gmra.mxu0 %v1113
        %v1227 = vpop.f32.mrf.mxu0
        %v1228 = vadd.f32 %v923, %v1227
        %v1229 = vpop.f32.mrf.mxu0
        %v1230 = vpop.f32.mrf.mxu0
        %v1231 = vadd.f32 %v926, %v1230
        %v1232 = vpop.f32.mrf.mxu0
        %1233 = vmatprep.mubr.bf16.mxu0 0
        %1234 = vmatmul.mubr.bf16.gmra.mxu0 %v1114
        %v1235 = vpop.f32.mrf.mxu0
        %v1236 = vadd.f32 %v931, %v1235
        %v1237 = vpop.f32.mrf.mxu0
        %v1238 = vpop.f32.mrf.mxu0
        %v1239 = vadd.f32 %v934, %v1238
        %v1240 = vpop.f32.mrf.mxu0
        %1241 = vmatprep.mubr.bf16.mxu0 0
        %1242 = vmatmul.mubr.bf16.gmra.mxu0 %v1115
        %v1243 = vpop.f32.mrf.mxu0
        %v1244 = vadd.f32 %v939, %v1243
        %v1245 = vpop.f32.mrf.mxu0
        %v1246 = vpop.f32.mrf.mxu0
        %v1247 = vadd.f32 %v942, %v1246
        %v1248 = vpop.f32.mrf.mxu0
        %1249 = vmatprep.mubr.bf16.mxu0 0
        %1250 = vmatmul.mubr.bf16.gmra.mxu0 %v1116
        %v1251 = vpop.f32.mrf.mxu0
        %v1252 = vadd.f32 %v947, %v1251
        %v1253 = vpop.f32.mrf.mxu0
        %v1254 = vpop.f32.mrf.mxu0
        %v1255 = vadd.f32 %v950, %v1254
        %v1256 = vpop.f32.mrf.mxu0
        %1257 = vmatprep.mubr.bf16.mxu0 0
        %1258 = vmatmul.mubr.bf16.gmra.mxu0 %v1117
        %v1259 = vpop.f32.mrf.mxu0
        %v1260 = vadd.f32 %v955, %v1259
        %v1261 = vpop.f32.mrf.mxu0
        %v1262 = vpop.f32.mrf.mxu0
        %v1263 = vadd.f32 %v958, %v1262
        %v1264 = vpop.f32.mrf.mxu0
        %1265 = vmatprep.mubr.bf16.mxu0 0
        %1266 = vmatmul.mubr.bf16.gmra.mxu0 %v1118
        %v1267 = vpop.f32.mrf.mxu0
        %v1268 = vadd.f32 %v963, %v1267
        %v1269 = vpop.f32.mrf.mxu0
        %v1270 = vpop.f32.mrf.mxu0
        %v1271 = vadd.f32 %v966, %v1270
        %v1272 = vpop.f32.mrf.mxu0
        %1273 = vmatprep.mubr.bf16.mxu0 0
        %1274 = vmatmul.mubr.bf16.gmra.mxu0 %v1119
        %v1275 = vpop.f32.mrf.mxu0
        %v1276 = vadd.f32 %v971, %v1275
        %v1277 = vpop.f32.mrf.mxu0
        %v1278 = vpop.f32.mrf.mxu0
        %v1279 = vadd.f32 %v974, %v1278
        %v1280 = vpop.f32.mrf.mxu0
        %1281 = vmatprep.mubr.bf16.mxu0 0
        %1282 = vmatmul.mubr.bf16.gmra.mxu0 %v1120
        %v1283 = vpop.f32.mrf.mxu0
        %v1284 = vadd.f32 %v979, %v1283
        %v1285 = vpop.f32.mrf.mxu0
        %v1286 = vpop.f32.mrf.mxu0
        %v1287 = vadd.f32 %v982, %v1286
        %v1288 = vpop.f32.mrf.mxu0
        %1289 = vmatprep.mubr.bf16.mxu0 0
        %1290 = vmatmul.mubr.bf16.gmra.mxu0 %v1121
        %v1291 = vpop.f32.mrf.mxu0
        %v1292 = vadd.f32 %v987, %v1291
        %v1293 = vpop.f32.mrf.mxu0
        %v1294 = vpop.f32.mrf.mxu0
        %v1295 = vadd.f32 %v990, %v1294
        %v1296 = vpop.f32.mrf.mxu0
        %1297 = vmatprep.mubr.bf16.mxu0 0
        %1298 = vmatmul.mubr.bf16.gmra.mxu0 %v1122
        %v1299 = vpop.f32.mrf.mxu0
        %v1300 = vadd.f32 %v995, %v1299
        %v1301 = vpop.f32.mrf.mxu0
        %v1302 = vpop.f32.mrf.mxu0
        %v1303 = vadd.f32 %v998, %v1302
        %v1304 = vpop.f32.mrf.mxu0
        %1305 = vmatprep.mubr.bf16.mxu0 0
        %1306 = vmatmul.mubr.bf16.gmra.mxu0 %v1123
        %v1307 = vpop.f32.mrf.mxu0
        %v1308 = vadd.f32 %v1003, %v1307
        %v1309 = vpop.f32.mrf.mxu0
        %v1310 = vpop.f32.mrf.mxu0
        %v1311 = vadd.f32 %v1006, %v1310
        %v1312 = vpop.f32.mrf.mxu0
        %1313 = vmatprep.mubr.bf16.mxu0 0
        %1314 = vmatmul.mubr.bf16.gmra.mxu0 %v1124
        %v1315 = vpop.f32.mrf.mxu0
        %v1316 = vadd.f32 %v1011, %v1315
        %v1317 = vpop.f32.mrf.mxu0
        %v1318 = vpop.f32.mrf.mxu0
        %v1319 = vadd.f32 %v1014, %v1318
        %v1320 = vpop.f32.mrf.mxu0
        %1321 = vmatprep.mubr.bf16.mxu0 0
        %1322 = vmatmul.mubr.bf16.gmra.mxu0 %v1125
        %v1323 = vpop.f32.mrf.mxu0
        %v1324 = vadd.f32 %v1019, %v1323
        %v1325 = vpop.f32.mrf.mxu0
        %v1326 = vpop.f32.mrf.mxu0
        %v1327 = vadd.f32 %v1022, %v1326
        %v1328 = vpop.f32.mrf.mxu0
        %1329 = vmatprep.mubr.bf16.mxu0 0
        %1330 = vmatmul.mubr.bf16.gmra.mxu0 %v1126
        %v1331 = vpop.f32.mrf.mxu0
        %v1332 = vadd.f32 %v1027, %v1331
        %v1333 = vpop.f32.mrf.mxu0
        %v1334 = vpop.f32.mrf.mxu0
        %v1335 = vadd.f32 %v1030, %v1334
        %v1336 = vpop.f32.mrf.mxu0
        %1337 = vmatprep.mubr.bf16.mxu0 0
        %1338 = vmatmul.mubr.bf16.gmra.mxu0 %v1127
        %v1339 = vpop.f32.mrf.mxu0
        %v1340 = vadd.f32 %v1035, %v1339
        %v1341 = vpop.f32.mrf.mxu0
        %v1342 = vpop.f32.mrf.mxu0
        %v1343 = vadd.f32 %v1038, %v1342
        %v1344 = vpop.f32.mrf.mxu0
        %1345 = vmatprep.mubr.bf16.mxu0 0
        %1346 = vmatmul.mubr.bf16.gmra.mxu0 %v1128
        %v1347 = vpop.f32.mrf.mxu0
        %v1348 = vadd.f32 %v1043, %v1347
        %v1349 = vpop.f32.mrf.mxu0
        %v1350 = vpop.f32.mrf.mxu0
        %v1351 = vadd.f32 %v1046, %v1350
        %v1352 = vpop.f32.mrf.mxu0
        %1353 = vdwg.mxu0
        %v1354 = vld [vmem:[%s238] sm:$0xe]
        %v1355 = vld [vmem:[%s238 + $0xc] sm:$0xe]
        %v1356 = vld [vmem:[%s238 + $0x18] sm:$0xe]
        %v1357 = vld [vmem:[%s238 + $0x24] sm:$0xe]
        %v1358 = vld [vmem:[%s238 + $0x30] sm:$0xe]
        %v1359 = vld [vmem:[%s238 + $0x3c] sm:$0xe]
        %v1360 = vld [vmem:[%s238 + $0x48] sm:$0xe]
        %v1361 = vld [vmem:[%s238 + $0x54] sm:$0xe]
        %v1362 = vld [vmem:[%s238 + $0x60] sm:$0xe]
        %v1363 = vld [vmem:[%s238 + $0x6c] sm:$0xe]
        %v1364 = vld [vmem:[%s238 + $0x78] sm:$0xe]
        %v1365 = vld [vmem:[%s238 + $0x84] sm:$0xe]
        %v1366 = vld [vmem:[%s238 + $0x90] sm:$0xe]
        %v1367 = vld [vmem:[%s238 + $0x9c] sm:$0xe]
        %v1368 = vld [vmem:[%s238 + $0xa8] sm:$0xe]
        %v1369 = vld [vmem:[%s238 + $0xb4] sm:$0xe]
        %vm1418 = vcmask 1042432
        %vm1419 = vcmask 1046532
        %vm1420 = vmor %vm1418, %vm1419
        %v1421 = vrot.slane %v1354, 5
        %v1422 = vrot.slane %v1421, 4
        %v1423 = vrot.slane %v325, 5
        %v1424 = vsel %vm1420, %v1422, %v1423
        %v1425 = vrot.slane %v1423, 4
        %v1426 = vrot.slane %v326, 5
        %v1427 = vsel %vm1420, %v1425, %v1426
        %v1428 = vrot.slane %v1355, 5
        %v1429 = vrot.slane %v1428, 4
        %v1430 = vrot.slane %v328, 5
        %v1431 = vsel %vm1420, %v1429, %v1430
        %v1432 = vrot.slane %v1430, 4
        %v1433 = vrot.slane %v329, 5
        %v1434 = vsel %vm1420, %v1432, %v1433
        %v1435 = vrot.slane %v1356, 5
        %v1436 = vrot.slane %v1435, 4
        %v1437 = vrot.slane %v331, 5
        %v1438 = vsel %vm1420, %v1436, %v1437
        %v1439 = vrot.slane %v1437, 4
        %v1440 = vrot.slane %v332, 5
        %v1441 = vsel %vm1420, %v1439, %v1440
        %v1442 = vrot.slane %v1357, 5
        %v1443 = vrot.slane %v1442, 4
        %v1444 = vrot.slane %v334, 5
        %v1445 = vsel %vm1420, %v1443, %v1444
        %v1446 = vrot.slane %v1444, 4
        %v1447 = vrot.slane %v335, 5
        %v1448 = vsel %vm1420, %v1446, %v1447
        %v1449 = vrot.slane %v1358, 5
        %v1450 = vrot.slane %v1449, 4
        %v1451 = vrot.slane %v337, 5
        %v1452 = vsel %vm1420, %v1450, %v1451
        %v1453 = vrot.slane %v1451, 4
        %v1454 = vrot.slane %v338, 5
        %v1455 = vsel %vm1420, %v1453, %v1454
        %v1456 = vrot.slane %v1359, 5
        %v1457 = vrot.slane %v1456, 4
        %v1458 = vrot.slane %v340, 5
        %v1459 = vsel %vm1420, %v1457, %v1458
        %v1460 = vrot.slane %v1458, 4
        %v1461 = vrot.slane %v341, 5
        %v1462 = vsel %vm1420, %v1460, %v1461
        %v1463 = vrot.slane %v1360, 5
        %v1464 = vrot.slane %v1463, 4
        %v1465 = vrot.slane %v343, 5
        %v1466 = vsel %vm1420, %v1464, %v1465
        %v1467 = vrot.slane %v1465, 4
        %v1468 = vrot.slane %v344, 5
        %v1469 = vsel %vm1420, %v1467, %v1468
        %v1470 = vrot.slane %v1361, 5
        %v1471 = vrot.slane %v1470, 4
        %v1472 = vrot.slane %v346, 5
        %v1473 = vsel %vm1420, %v1471, %v1472
        %v1474 = vrot.slane %v1472, 4
        %v1475 = vrot.slane %v347, 5
        %v1476 = vsel %vm1420, %v1474, %v1475
        %v1477 = vrot.slane %v1362, 5
        %v1478 = vrot.slane %v1477, 4
        %v1479 = vrot.slane %v349, 5
        %v1480 = vsel %vm1420, %v1478, %v1479
        %v1481 = vrot.slane %v1479, 4
        %v1482 = vrot.slane %v350, 5
        %v1483 = vsel %vm1420, %v1481, %v1482
        %v1484 = vrot.slane %v1363, 5
        %v1485 = vrot.slane %v1484, 4
        %v1486 = vrot.slane %v352, 5
        %v1487 = vsel %vm1420, %v1485, %v1486
        %v1488 = vrot.slane %v1486, 4
        %v1489 = vrot.slane %v353, 5
        %v1490 = vsel %vm1420, %v1488, %v1489
        %v1491 = vrot.slane %v1364, 5
        %v1492 = vrot.slane %v1491, 4
        %v1493 = vrot.slane %v355, 5
        %v1494 = vsel %vm1420, %v1492, %v1493
        %v1495 = vrot.slane %v1493, 4
        %v1496 = vrot.slane %v356, 5
        %v1497 = vsel %vm1420, %v1495, %v1496
        %v1498 = vrot.slane %v1365, 5
        %v1499 = vrot.slane %v1498, 4
        %v1500 = vrot.slane %v358, 5
        %v1501 = vsel %vm1420, %v1499, %v1500
        %v1502 = vrot.slane %v1500, 4
        %v1503 = vrot.slane %v359, 5
        %v1504 = vsel %vm1420, %v1502, %v1503
        %v1505 = vrot.slane %v1366, 5
        %v1506 = vrot.slane %v1505, 4
        %v1507 = vrot.slane %v361, 5
        %v1508 = vsel %vm1420, %v1506, %v1507
        %v1509 = vrot.slane %v1507, 4
        %v1510 = vrot.slane %v362, 5
        %v1511 = vsel %vm1420, %v1509, %v1510
        %v1512 = vrot.slane %v1367, 5
        %v1513 = vrot.slane %v1512, 4
        %v1514 = vrot.slane %v364, 5
        %v1515 = vsel %vm1420, %v1513, %v1514
        %v1516 = vrot.slane %v1514, 4
        %v1517 = vrot.slane %v365, 5
        %v1518 = vsel %vm1420, %v1516, %v1517
        %v1519 = vrot.slane %v1368, 5
        %v1520 = vrot.slane %v1519, 4
        %v1521 = vrot.slane %v367, 5
        %v1522 = vsel %vm1420, %v1520, %v1521
        %v1523 = vrot.slane %v1521, 4
        %v1524 = vrot.slane %v368, 5
        %v1525 = vsel %vm1420, %v1523, %v1524
        %v1526 = vrot.slane %v1369, 5
        %v1527 = vrot.slane %v1526, 4
        %v1528 = vrot.slane %v370, 5
        %v1529 = vsel %vm1420, %v1527, %v1528
        %v1530 = vrot.slane %v1528, 4
        %v1531 = vrot.slane %v371, 5
        %v1532 = vsel %vm1420, %v1530, %v1531
        %s1533 = scalar_lea.vmem [#allocation5], 128
        %v1534 = vld [vmem:[%s1533] sm:$0xf]
        %v1535 = vld [vmem:[%s1533 + $0x4] sm:$0xf]
        %v1536 = vld [vmem:[%s1533 + $0x8] sm:$0xf]
        %v1537 = vld [vmem:[%s1533 + $0xc] sm:$0xf]
        %v1538 = vld [vmem:[%s1533 + $0x10] sm:$0xf]
        %v1539 = vld [vmem:[%s1533 + $0x14] sm:$0xf]
        %v1540 = vld [vmem:[%s1533 + $0x18] sm:$0xf]
        %v1541 = vld [vmem:[%s1533 + $0x1c] sm:$0xf]
        %v1542 = vld [vmem:[%s1533 + $0x20] sm:$0xf]
        %v1543 = vld [vmem:[%s1533 + $0x24] sm:$0xf]
        %v1544 = vld [vmem:[%s1533 + $0x28] sm:$0xf]
        %v1545 = vld [vmem:[%s1533 + $0x2c] sm:$0xf]
        %v1546 = vld [vmem:[%s1533 + $0x30] sm:$0xf]
        %v1547 = vld [vmem:[%s1533 + $0x34] sm:$0xf]
        %v1548 = vld [vmem:[%s1533 + $0x38] sm:$0xf]
        %v1549 = vld [vmem:[%s1533 + $0x3c] sm:$0xf]
        %v1550 = vunpack.c.l.b16 %v1424
        %v1551 = vunpack.c.l.b16 %v1427
        %v1552 = vunpack.c.l.b16 %v1431
        %v1553 = vunpack.c.l.b16 %v1434
        %v1554 = vunpack.c.l.b16 %v1438
        %v1555 = vunpack.c.l.b16 %v1441
        %v1556 = vunpack.c.l.b16 %v1445
        %v1557 = vunpack.c.l.b16 %v1448
        %v1558 = vunpack.c.l.b16 %v1452
        %v1559 = vunpack.c.l.b16 %v1455
        %v1560 = vunpack.c.l.b16 %v1459
        %v1561 = vunpack.c.l.b16 %v1462
        %v1562 = vunpack.c.l.b16 %v1466
        %v1563 = vunpack.c.l.b16 %v1469
        %v1564 = vunpack.c.l.b16 %v1473
        %v1565 = vunpack.c.l.b16 %v1476
        %v1566 = vunpack.c.l.b16 %v1480
        %v1567 = vunpack.c.l.b16 %v1483
        %v1568 = vunpack.c.l.b16 %v1487
        %v1569 = vunpack.c.l.b16 %v1490
        %v1570 = vunpack.c.l.b16 %v1494
        %v1571 = vunpack.c.l.b16 %v1497
        %v1572 = vunpack.c.l.b16 %v1501
        %v1573 = vunpack.c.l.b16 %v1504
        %v1574 = vunpack.c.l.b16 %v1508
        %v1575 = vunpack.c.l.b16 %v1511
        %v1576 = vunpack.c.l.b16 %v1515
        %v1577 = vunpack.c.l.b16 %v1518
        %v1578 = vunpack.c.l.b16 %v1522
        %v1579 = vunpack.c.l.b16 %v1525
        %v1580 = vunpack.c.l.b16 %v1529
        %v1581 = vunpack.c.l.b16 %v1532
        %v1582 = vpack.c.b16 %v1551, %v1550
        %v1583 = vpack.c.b16 %v1553, %v1552
        %v1584 = vpack.c.b16 %v1555, %v1554
        %v1585 = vpack.c.b16 %v1557, %v1556
        %v1586 = vpack.c.b16 %v1559, %v1558
        %v1587 = vpack.c.b16 %v1561, %v1560
        %v1588 = vpack.c.b16 %v1563, %v1562
        %v1589 = vpack.c.b16 %v1565, %v1564
        %v1590 = vpack.c.b16 %v1567, %v1566
        %v1591 = vpack.c.b16 %v1569, %v1568
        %v1592 = vpack.c.b16 %v1571, %v1570
        %v1593 = vpack.c.b16 %v1573, %v1572
        %v1594 = vpack.c.b16 %v1575, %v1574
        %v1595 = vpack.c.b16 %v1577, %v1576
        %v1596 = vpack.c.b16 %v1579, %v1578
        %v1597 = vpack.c.b16 %v1581, %v1580
        %v1630 = vunpack.c.l.b16 %v1534
        %v1631 = vunpack.c.l.b16 %v1535
        %v1632 = vunpack.c.l.b16 %v1536
        %v1633 = vunpack.c.l.b16 %v1537
        %v1634 = vunpack.c.l.b16 %v1538
        %v1635 = vunpack.c.l.b16 %v1539
        %v1636 = vunpack.c.l.b16 %v1540
        %v1637 = vunpack.c.l.b16 %v1541
        %v1638 = vunpack.c.l.b16 %v1542
        %v1639 = vunpack.c.l.b16 %v1543
        %v1640 = vunpack.c.l.b16 %v1544
        %v1641 = vunpack.c.l.b16 %v1545
        %v1642 = vunpack.c.l.b16 %v1546
        %v1643 = vunpack.c.l.b16 %v1547
        %v1644 = vunpack.c.l.b16 %v1548
        %v1645 = vunpack.c.l.b16 %v1549
        %v1646 = vpack.c.b16 %v1631, %v1630
        %v1647 = vpack.c.b16 %v1633, %v1632
        %v1648 = vpack.c.b16 %v1635, %v1634
        %v1649 = vpack.c.b16 %v1637, %v1636
        %v1650 = vpack.c.b16 %v1639, %v1638
        %v1651 = vpack.c.b16 %v1641, %v1640
        %v1652 = vpack.c.b16 %v1643, %v1642
        %v1653 = vpack.c.b16 %v1645, %v1644
        %1662 = vmatprep.subr.bf16.mxu0 0
        %1663 = vmatpush1.bf16.msra.mxu0 %v1653
        %1664 = vmatprep.subr.bf16.mxu0 0
        %1665 = vmatpush1.bf16.msra.mxu0 %v1652
        %1666 = vmatprep.subr.bf16.mxu0 0
        %1667 = vmatpush1.bf16.msra.mxu0 %v1651
        %1668 = vmatprep.subr.bf16.mxu0 0
        %1669 = vmatpush1.bf16.msra.mxu0 %v1650
        %1670 = vmatprep.subr.bf16.mxu0 0
        %1671 = vmatpush1.bf16.msra.mxu0 %v1649
        %1672 = vmatprep.subr.bf16.mxu0 0
        %1673 = vmatpush1.bf16.msra.mxu0 %v1648
        %1674 = vmatprep.subr.bf16.mxu0 0
        %1675 = vmatpush1.bf16.msra.mxu0 %v1647
        %1676 = vmatprep.subr.bf16.mxu0 0
        %1677 = vmatpush1.bf16.msra.mxu0 %v1646
        %1678 = vmatprep.subr.bf16.mxu0 0
        %1679 = vmatpush2.bf16.msra.mxu0 0
        %1680 = vmatprep.subr.bf16.mxu0 0
        %1681 = vmatpush2.bf16.msra.mxu0 0
        %1682 = vmatprep.subr.bf16.mxu0 0
        %1683 = vmatpush2.bf16.msra.mxu0 0
        %1684 = vmatprep.subr.bf16.mxu0 0
        %1685 = vmatpush2.bf16.msra.mxu0 0
        %1686 = vmatprep.subr.bf16.mxu0 0
        %1687 = vmatpush2.bf16.msra.mxu0 0
        %1688 = vmatprep.subr.bf16.mxu0 0
        %1689 = vmatpush2.bf16.msra.mxu0 0
        %1690 = vmatprep.subr.bf16.mxu0 0
        %1691 = vmatpush2.bf16.msra.mxu0 0
        %1692 = vmatprep.subr.bf16.mxu0 0
        %1693 = vmatpush2.bf16.msra.mxu0 0
        %1694 = vmatprep.mubr.bf16.mxu0 0
        %1695 = vmatmul.mubr.bf16.gmra.mxu0 %v1582
        %v1696 = vpop.f32.mrf.mxu0
        %v1697 = vadd.f32 0.0, %v1696
        %v1698 = vpop.f32.mrf.mxu0
        %v1699 = vpop.f32.mrf.mxu0
        %v1700 = vadd.f32 0.0, %v1699
        %v1701 = vpop.f32.mrf.mxu0
        %1702 = vmatprep.mubr.bf16.mxu0 0
        %1703 = vmatmul.mubr.bf16.gmra.mxu0 %v1583
        %v1704 = vpop.f32.mrf.mxu0
        %v1705 = vadd.f32 0.0, %v1704
        %v1706 = vpop.f32.mrf.mxu0
        %v1707 = vpop.f32.mrf.mxu0
        %v1708 = vadd.f32 0.0, %v1707
        %v1709 = vpop.f32.mrf.mxu0
        %1710 = vmatprep.mubr.bf16.mxu0 0
        %1711 = vmatmul.mubr.bf16.gmra.mxu0 %v1584
        %v1712 = vpop.f32.mrf.mxu0
        %v1713 = vadd.f32 0.0, %v1712
        %v1714 = vpop.f32.mrf.mxu0
        %v1715 = vpop.f32.mrf.mxu0
        %v1716 = vadd.f32 0.0, %v1715
        %v1717 = vpop.f32.mrf.mxu0
        %1718 = vmatprep.mubr.bf16.mxu0 0
        %1719 = vmatmul.mubr.bf16.gmra.mxu0 %v1585
        %v1720 = vpop.f32.mrf.mxu0
        %v1721 = vadd.f32 0.0, %v1720
        %v1722 = vpop.f32.mrf.mxu0
        %v1723 = vpop.f32.mrf.mxu0
        %v1724 = vadd.f32 0.0, %v1723
        %v1725 = vpop.f32.mrf.mxu0
        %1726 = vmatprep.mubr.bf16.mxu0 0
        %1727 = vmatmul.mubr.bf16.gmra.mxu0 %v1586
        %v1728 = vpop.f32.mrf.mxu0
        %v1729 = vadd.f32 0.0, %v1728
        %v1730 = vpop.f32.mrf.mxu0
        %v1731 = vpop.f32.mrf.mxu0
        %v1732 = vadd.f32 0.0, %v1731
        %v1733 = vpop.f32.mrf.mxu0
        %1734 = vmatprep.mubr.bf16.mxu0 0
        %1735 = vmatmul.mubr.bf16.gmra.mxu0 %v1587
        %v1736 = vpop.f32.mrf.mxu0
        %v1737 = vadd.f32 0.0, %v1736
        %v1738 = vpop.f32.mrf.mxu0
        %v1739 = vpop.f32.mrf.mxu0
        %v1740 = vadd.f32 0.0, %v1739
        %v1741 = vpop.f32.mrf.mxu0
        %1742 = vmatprep.mubr.bf16.mxu0 0
        %1743 = vmatmul.mubr.bf16.gmra.mxu0 %v1588
        %v1744 = vpop.f32.mrf.mxu0
        %v1745 = vadd.f32 0.0, %v1744
        %v1746 = vpop.f32.mrf.mxu0
        %v1747 = vpop.f32.mrf.mxu0
        %v1748 = vadd.f32 0.0, %v1747
        %v1749 = vpop.f32.mrf.mxu0
        %1750 = vmatprep.mubr.bf16.mxu0 0
        %1751 = vmatmul.mubr.bf16.gmra.mxu0 %v1589
        %v1752 = vpop.f32.mrf.mxu0
        %v1753 = vadd.f32 0.0, %v1752
        %v1754 = vpop.f32.mrf.mxu0
        %v1755 = vpop.f32.mrf.mxu0
        %v1756 = vadd.f32 0.0, %v1755
        %v1757 = vpop.f32.mrf.mxu0
        %1758 = vmatprep.mubr.bf16.mxu0 0
        %1759 = vmatmul.mubr.bf16.gmra.mxu0 %v1590
        %v1760 = vpop.f32.mrf.mxu0
        %v1761 = vadd.f32 0.0, %v1760
        %v1762 = vpop.f32.mrf.mxu0
        %v1763 = vpop.f32.mrf.mxu0
        %v1764 = vadd.f32 0.0, %v1763
        %v1765 = vpop.f32.mrf.mxu0
        %1766 = vmatprep.mubr.bf16.mxu0 0
        %1767 = vmatmul.mubr.bf16.gmra.mxu0 %v1591
        %v1768 = vpop.f32.mrf.mxu0
        %v1769 = vadd.f32 0.0, %v1768
        %v1770 = vpop.f32.mrf.mxu0
        %v1771 = vpop.f32.mrf.mxu0
        %v1772 = vadd.f32 0.0, %v1771
        %v1773 = vpop.f32.mrf.mxu0
        %1774 = vmatprep.mubr.bf16.mxu0 0
        %1775 = vmatmul.mubr.bf16.gmra.mxu0 %v1592
        %v1776 = vpop.f32.mrf.mxu0
        %v1777 = vadd.f32 0.0, %v1776
        %v1778 = vpop.f32.mrf.mxu0
        %v1779 = vpop.f32.mrf.mxu0
        %v1780 = vadd.f32 0.0, %v1779
        %v1781 = vpop.f32.mrf.mxu0
        %1782 = vmatprep.mubr.bf16.mxu0 0
        %1783 = vmatmul.mubr.bf16.gmra.mxu0 %v1593
        %v1784 = vpop.f32.mrf.mxu0
        %v1785 = vadd.f32 0.0, %v1784
        %v1786 = vpop.f32.mrf.mxu0
        %v1787 = vpop.f32.mrf.mxu0
        %v1788 = vadd.f32 0.0, %v1787
        %v1789 = vpop.f32.mrf.mxu0
        %1790 = vmatprep.mubr.bf16.mxu0 0
        %1791 = vmatmul.mubr.bf16.gmra.mxu0 %v1594
        %v1792 = vpop.f32.mrf.mxu0
        %v1793 = vadd.f32 0.0, %v1792
        %v1794 = vpop.f32.mrf.mxu0
        %v1795 = vpop.f32.mrf.mxu0
        %v1796 = vadd.f32 0.0, %v1795
        %v1797 = vpop.f32.mrf.mxu0
        %1798 = vmatprep.mubr.bf16.mxu0 0
        %1799 = vmatmul.mubr.bf16.gmra.mxu0 %v1595
        %v1800 = vpop.f32.mrf.mxu0
        %v1801 = vadd.f32 0.0, %v1800
        %v1802 = vpop.f32.mrf.mxu0
        %v1803 = vpop.f32.mrf.mxu0
        %v1804 = vadd.f32 0.0, %v1803
        %v1805 = vpop.f32.mrf.mxu0
        %1806 = vmatprep.mubr.bf16.mxu0 0
        %1807 = vmatmul.mubr.bf16.gmra.mxu0 %v1596
        %v1808 = vpop.f32.mrf.mxu0
        %v1809 = vadd.f32 0.0, %v1808
        %v1810 = vpop.f32.mrf.mxu0
        %v1811 = vpop.f32.mrf.mxu0
        %v1812 = vadd.f32 0.0, %v1811
        %v1813 = vpop.f32.mrf.mxu0
        %1814 = vmatprep.mubr.bf16.mxu0 0
        %1815 = vmatmul.mubr.bf16.gmra.mxu0 %v1597
        %v1816 = vpop.f32.mrf.mxu0
        %v1817 = vadd.f32 0.0, %v1816
        %v1818 = vpop.f32.mrf.mxu0
        %v1819 = vpop.f32.mrf.mxu0
        %v1820 = vadd.f32 0.0, %v1819
        %v1821 = vpop.f32.mrf.mxu0
        %1822 = vdwg.mxu0
        %v1823 = vadd.f32 %v1228, %v1697
        %v1824 = vadd.f32 %v1231, %v1700
        %v1825 = vadd.f32 %v1236, %v1705
        %v1826 = vadd.f32 %v1239, %v1708
        %v1827 = vadd.f32 %v1244, %v1713
        %v1828 = vadd.f32 %v1247, %v1716
        %v1829 = vadd.f32 %v1252, %v1721
        %v1830 = vadd.f32 %v1255, %v1724
        %v1831 = vadd.f32 %v1260, %v1729
        %v1832 = vadd.f32 %v1263, %v1732
        %v1833 = vadd.f32 %v1268, %v1737
        %v1834 = vadd.f32 %v1271, %v1740
        %v1835 = vadd.f32 %v1276, %v1745
        %v1836 = vadd.f32 %v1279, %v1748
        %v1837 = vadd.f32 %v1284, %v1753
        %v1838 = vadd.f32 %v1287, %v1756
        %v1839 = vadd.f32 %v1292, %v1761
        %v1840 = vadd.f32 %v1295, %v1764
        %v1841 = vadd.f32 %v1300, %v1769
        %v1842 = vadd.f32 %v1303, %v1772
        %v1843 = vadd.f32 %v1308, %v1777
        %v1844 = vadd.f32 %v1311, %v1780
        %v1845 = vadd.f32 %v1316, %v1785
        %v1846 = vadd.f32 %v1319, %v1788
        %v1847 = vadd.f32 %v1324, %v1793
        %v1848 = vadd.f32 %v1327, %v1796
        %v1849 = vadd.f32 %v1332, %v1801
        %v1850 = vadd.f32 %v1335, %v1804
        %v1851 = vadd.f32 %v1340, %v1809
        %v1852 = vadd.f32 %v1343, %v1812
        %v1853 = vadd.f32 %v1348, %v1817
        %v1854 = vadd.f32 %v1351, %v1820
        %v1855 = vld [vmem:[%s238 + $0x8] sm:$0x3]
        %v1856 = vld [vmem:[%s238 + $0x14] sm:$0x3]
        %v1857 = vld [vmem:[%s238 + $0x20] sm:$0x3]
        %v1858 = vld [vmem:[%s238 + $0x2c] sm:$0x3]
        %v1859 = vld [vmem:[%s238 + $0x38] sm:$0x3]
        %v1860 = vld [vmem:[%s238 + $0x44] sm:$0x3]
        %v1861 = vld [vmem:[%s238 + $0x50] sm:$0x3]
        %v1862 = vld [vmem:[%s238 + $0x5c] sm:$0x3]
        %v1863 = vld [vmem:[%s238 + $0x68] sm:$0x3]
        %v1864 = vld [vmem:[%s238 + $0x74] sm:$0x3]
        %v1865 = vld [vmem:[%s238 + $0x80] sm:$0x3]
        %v1866 = vld [vmem:[%s238 + $0x8c] sm:$0x3]
        %v1867 = vld [vmem:[%s238 + $0x98] sm:$0x3]
        %v1868 = vld [vmem:[%s238 + $0xa4] sm:$0x3]
        %v1869 = vld [vmem:[%s238 + $0xb0] sm:$0x3]
        %v1870 = vld [vmem:[%s238 + $0xbc] sm:$0x3]
        %vm1871 = vsmask.f32 2304
        %vm1872 = vsmask.f32 6416
        %vm1873 = vmor %vm1871, %vm1872
        %v1875 = vshrl.u32 %v1354, 16
        %v1877 = vrot.slane %v1875, 5
        %v1878 = vshll.u32 %v1354, 16
        %v1880 = vrot.slane %v1878, 6
        %v1881 = vor.u32 %v1877, %v1880
        %v1882 = vrot.slane %v1881, 4
        %v1883 = vrot.slane %v389, 5
        %v1884 = vrot.slane %v385, 6
        %v1885 = vor.u32 %v1883, %v1884
        %v1886 = vsel %vm1873, %v1882, %v1885
        %v1887 = vrot.slane %v1885, 4
        %v1889 = vshrl.u32 %v1855, 16
        %v1891 = vrot.slane %v1889, 5
        %v1892 = vshll.u32 %v1855, 16
        %v1894 = vrot.slane %v1892, 6
        %v1895 = vor.u32 %v1891, %v1894
        %v1896 = vsel %vm1873, %v1887, %v1895
        %v1898 = vshrl.u32 %v1355, 16
        %v1900 = vrot.slane %v1898, 5
        %v1901 = vshll.u32 %v1355, 16
        %v1903 = vrot.slane %v1901, 6
        %v1904 = vor.u32 %v1900, %v1903
        %v1905 = vrot.slane %v1904, 4
        %v1906 = vrot.slane %v413, 5
        %v1907 = vrot.slane %v409, 6
        %v1908 = vor.u32 %v1906, %v1907
        %v1909 = vsel %vm1873, %v1905, %v1908
        %v1910 = vrot.slane %v1908, 4
        %v1912 = vshrl.u32 %v1856, 16
        %v1914 = vrot.slane %v1912, 5
        %v1915 = vshll.u32 %v1856, 16
        %v1917 = vrot.slane %v1915, 6
        %v1918 = vor.u32 %v1914, %v1917
        %v1919 = vsel %vm1873, %v1910, %v1918
        %v1921 = vshrl.u32 %v1356, 16
        %v1923 = vrot.slane %v1921, 5
        %v1924 = vshll.u32 %v1356, 16
        %v1926 = vrot.slane %v1924, 6
        %v1927 = vor.u32 %v1923, %v1926
        %v1928 = vrot.slane %v1927, 4
        %v1929 = vrot.slane %v437, 5
        %v1930 = vrot.slane %v433, 6
        %v1931 = vor.u32 %v1929, %v1930
        %v1932 = vsel %vm1873, %v1928, %v1931
        %v1933 = vrot.slane %v1931, 4
        %v1935 = vshrl.u32 %v1857, 16
        %v1937 = vrot.slane %v1935, 5
        %v1938 = vshll.u32 %v1857, 16
        %v1940 = vrot.slane %v1938, 6
        %v1941 = vor.u32 %v1937, %v1940
        %v1942 = vsel %vm1873, %v1933, %v1941
        %v1944 = vshrl.u32 %v1357, 16
        %v1946 = vrot.slane %v1944, 5
        %v1947 = vshll.u32 %v1357, 16
        %v1949 = vrot.slane %v1947, 6
        %v1950 = vor.u32 %v1946, %v1949
        %v1951 = vrot.slane %v1950, 4
        %v1952 = vrot.slane %v461, 5
        %v1953 = vrot.slane %v457, 6
        %v1954 = vor.u32 %v1952, %v1953
        %v1955 = vsel %vm1873, %v1951, %v1954
        %v1956 = vrot.slane %v1954, 4
        %v1958 = vshrl.u32 %v1858, 16
        %v1960 = vrot.slane %v1958, 5
        %v1961 = vshll.u32 %v1858, 16
        %v1963 = vrot.slane %v1961, 6
        %v1964 = vor.u32 %v1960, %v1963
        %v1965 = vsel %vm1873, %v1956, %v1964
        %v1967 = vshrl.u32 %v1358, 16
        %v1969 = vrot.slane %v1967, 5
        %v1970 = vshll.u32 %v1358, 16
        %v1972 = vrot.slane %v1970, 6
        %v1973 = vor.u32 %v1969, %v1972
        %v1974 = vrot.slane %v1973, 4
        %v1975 = vrot.slane %v485, 5
        %v1976 = vrot.slane %v481, 6
        %v1977 = vor.u32 %v1975, %v1976
        %v1978 = vsel %vm1873, %v1974, %v1977
        %v1979 = vrot.slane %v1977, 4
        %v1981 = vshrl.u32 %v1859, 16
        %v1983 = vrot.slane %v1981, 5
        %v1984 = vshll.u32 %v1859, 16
        %v1986 = vrot.slane %v1984, 6
        %v1987 = vor.u32 %v1983, %v1986
        %v1988 = vsel %vm1873, %v1979, %v1987
        %v1990 = vshrl.u32 %v1359, 16
        %v1992 = vrot.slane %v1990, 5
        %v1993 = vshll.u32 %v1359, 16
        %v1995 = vrot.slane %v1993, 6
        %v1996 = vor.u32 %v1992, %v1995
        %v1997 = vrot.slane %v1996, 4
        %v1998 = vrot.slane %v509, 5
        %v1999 = vrot.slane %v505, 6
        %v2000 = vor.u32 %v1998, %v1999
        %v2001 = vsel %vm1873, %v1997, %v2000
        %v2002 = vrot.slane %v2000, 4
        %v2004 = vshrl.u32 %v1860, 16
        %v2006 = vrot.slane %v2004, 5
        %v2007 = vshll.u32 %v1860, 16
        %v2009 = vrot.slane %v2007, 6
        %v2010 = vor.u32 %v2006, %v2009
        %v2011 = vsel %vm1873, %v2002, %v2010
        %v2013 = vshrl.u32 %v1360, 16
        %v2015 = vrot.slane %v2013, 5
        %v2016 = vshll.u32 %v1360, 16
        %v2018 = vrot.slane %v2016, 6
        %v2019 = vor.u32 %v2015, %v2018
        %v2020 = vrot.slane %v2019, 4
        %v2021 = vrot.slane %v533, 5
        %v2022 = vrot.slane %v529, 6
        %v2023 = vor.u32 %v2021, %v2022
        %v2024 = vsel %vm1873, %v2020, %v2023
        %v2025 = vrot.slane %v2023, 4
        %v2027 = vshrl.u32 %v1861, 16
        %v2029 = vrot.slane %v2027, 5
        %v2030 = vshll.u32 %v1861, 16
        %v2032 = vrot.slane %v2030, 6
        %v2033 = vor.u32 %v2029, %v2032
        %v2034 = vsel %vm1873, %v2025, %v2033
        %v2036 = vshrl.u32 %v1361, 16
        %v2038 = vrot.slane %v2036, 5
        %v2039 = vshll.u32 %v1361, 16
        %v2041 = vrot.slane %v2039, 6
        %v2042 = vor.u32 %v2038, %v2041
        %v2043 = vrot.slane %v2042, 4
        %v2044 = vrot.slane %v557, 5
        %v2045 = vrot.slane %v553, 6
        %v2046 = vor.u32 %v2044, %v2045
        %v2047 = vsel %vm1873, %v2043, %v2046
        %v2048 = vrot.slane %v2046, 4
        %v2050 = vshrl.u32 %v1862, 16
        %v2052 = vrot.slane %v2050, 5
        %v2053 = vshll.u32 %v1862, 16
        %v2055 = vrot.slane %v2053, 6
        %v2056 = vor.u32 %v2052, %v2055
        %v2057 = vsel %vm1873, %v2048, %v2056
        %v2059 = vshrl.u32 %v1362, 16
        %v2061 = vrot.slane %v2059, 5
        %v2062 = vshll.u32 %v1362, 16
        %v2064 = vrot.slane %v2062, 6
        %v2065 = vor.u32 %v2061, %v2064
        %v2066 = vrot.slane %v2065, 4
        %v2067 = vrot.slane %v581, 5
        %v2068 = vrot.slane %v577, 6
        %v2069 = vor.u32 %v2067, %v2068
        %v2070 = vsel %vm1873, %v2066, %v2069
        %v2071 = vrot.slane %v2069, 4
        %v2073 = vshrl.u32 %v1863, 16
        %v2075 = vrot.slane %v2073, 5
        %v2076 = vshll.u32 %v1863, 16
        %v2078 = vrot.slane %v2076, 6
        %v2079 = vor.u32 %v2075, %v2078
        %v2080 = vsel %vm1873, %v2071, %v2079
        %v2082 = vshrl.u32 %v1363, 16
        %v2084 = vrot.slane %v2082, 5
        %v2085 = vshll.u32 %v1363, 16
        %v2087 = vrot.slane %v2085, 6
        %v2088 = vor.u32 %v2084, %v2087
        %v2089 = vrot.slane %v2088, 4
        %v2090 = vrot.slane %v605, 5
        %v2091 = vrot.slane %v601, 6
        %v2092 = vor.u32 %v2090, %v2091
        %v2093 = vsel %vm1873, %v2089, %v2092
        %v2094 = vrot.slane %v2092, 4
        %v2096 = vshrl.u32 %v1864, 16
        %v2098 = vrot.slane %v2096, 5
        %v2099 = vshll.u32 %v1864, 16
        %v2101 = vrot.slane %v2099, 6
        %v2102 = vor.u32 %v2098, %v2101
        %v2103 = vsel %vm1873, %v2094, %v2102
        %v2105 = vshrl.u32 %v1364, 16
        %v2107 = vrot.slane %v2105, 5
        %v2108 = vshll.u32 %v1364, 16
        %v2110 = vrot.slane %v2108, 6
        %v2111 = vor.u32 %v2107, %v2110
        %v2112 = vrot.slane %v2111, 4
        %v2113 = vrot.slane %v629, 5
        %v2114 = vrot.slane %v625, 6
        %v2115 = vor.u32 %v2113, %v2114
        %v2116 = vsel %vm1873, %v2112, %v2115
        %v2117 = vrot.slane %v2115, 4
        %v2119 = vshrl.u32 %v1865, 16
        %v2121 = vrot.slane %v2119, 5
        %v2122 = vshll.u32 %v1865, 16
        %v2124 = vrot.slane %v2122, 6
        %v2125 = vor.u32 %v2121, %v2124
        %v2126 = vsel %vm1873, %v2117, %v2125
        %v2128 = vshrl.u32 %v1365, 16
        %v2130 = vrot.slane %v2128, 5
        %v2131 = vshll.u32 %v1365, 16
        %v2133 = vrot.slane %v2131, 6
        %v2134 = vor.u32 %v2130, %v2133
        %v2135 = vrot.slane %v2134, 4
        %v2136 = vrot.slane %v653, 5
        %v2137 = vrot.slane %v649, 6
        %v2138 = vor.u32 %v2136, %v2137
        %v2139 = vsel %vm1873, %v2135, %v2138
        %v2140 = vrot.slane %v2138, 4
        %v2142 = vshrl.u32 %v1866, 16
        %v2144 = vrot.slane %v2142, 5
        %v2145 = vshll.u32 %v1866, 16
        %v2147 = vrot.slane %v2145, 6
        %v2148 = vor.u32 %v2144, %v2147
        %v2149 = vsel %vm1873, %v2140, %v2148
        %v2151 = vshrl.u32 %v1366, 16
        %v2153 = vrot.slane %v2151, 5
        %v2154 = vshll.u32 %v1366, 16
        %v2156 = vrot.slane %v2154, 6
        %v2157 = vor.u32 %v2153, %v2156
        %v2158 = vrot.slane %v2157, 4
        %v2159 = vrot.slane %v677, 5
        %v2160 = vrot.slane %v673, 6
        %v2161 = vor.u32 %v2159, %v2160
        %v2162 = vsel %vm1873, %v2158, %v2161
        %v2163 = vrot.slane %v2161, 4
        %v2165 = vshrl.u32 %v1867, 16
        %v2167 = vrot.slane %v2165, 5
        %v2168 = vshll.u32 %v1867, 16
        %v2170 = vrot.slane %v2168, 6
        %v2171 = vor.u32 %v2167, %v2170
        %v2172 = vsel %vm1873, %v2163, %v2171
        %v2174 = vshrl.u32 %v1367, 16
        %v2176 = vrot.slane %v2174, 5
        %v2177 = vshll.u32 %v1367, 16
        %v2179 = vrot.slane %v2177, 6
        %v2180 = vor.u32 %v2176, %v2179
        %v2181 = vrot.slane %v2180, 4
        %v2182 = vrot.slane %v701, 5
        %v2183 = vrot.slane %v697, 6
        %v2184 = vor.u32 %v2182, %v2183
        %v2185 = vsel %vm1873, %v2181, %v2184
        %v2186 = vrot.slane %v2184, 4
        %v2188 = vshrl.u32 %v1868, 16
        %v2190 = vrot.slane %v2188, 5
        %v2191 = vshll.u32 %v1868, 16
        %v2193 = vrot.slane %v2191, 6
        %v2194 = vor.u32 %v2190, %v2193
        %v2195 = vsel %vm1873, %v2186, %v2194
        %v2197 = vshrl.u32 %v1368, 16
        %v2199 = vrot.slane %v2197, 5
        %v2200 = vshll.u32 %v1368, 16
        %v2202 = vrot.slane %v2200, 6
        %v2203 = vor.u32 %v2199, %v2202
        %v2204 = vrot.slane %v2203, 4
        %v2205 = vrot.slane %v725, 5
        %v2206 = vrot.slane %v721, 6
        %v2207 = vor.u32 %v2205, %v2206
        %v2208 = vsel %vm1873, %v2204, %v2207
        %v2209 = vrot.slane %v2207, 4
        %v2211 = vshrl.u32 %v1869, 16
        %v2213 = vrot.slane %v2211, 5
        %v2214 = vshll.u32 %v1869, 16
        %v2216 = vrot.slane %v2214, 6
        %v2217 = vor.u32 %v2213, %v2216
        %v2218 = vsel %vm1873, %v2209, %v2217
        %v2220 = vshrl.u32 %v1369, 16
        %v2222 = vrot.slane %v2220, 5
        %v2223 = vshll.u32 %v1369, 16
        %v2225 = vrot.slane %v2223, 6
        %v2226 = vor.u32 %v2222, %v2225
        %v2227 = vrot.slane %v2226, 4
        %v2228 = vrot.slane %v749, 5
        %v2229 = vrot.slane %v745, 6
        %v2230 = vor.u32 %v2228, %v2229
        %v2231 = vsel %vm1873, %v2227, %v2230
        %v2232 = vrot.slane %v2230, 4
        %v2234 = vshrl.u32 %v1870, 16
        %v2236 = vrot.slane %v2234, 5
        %v2237 = vshll.u32 %v1870, 16
        %v2239 = vrot.slane %v2237, 6
        %v2240 = vor.u32 %v2236, %v2239
        %v2241 = vsel %vm1873, %v2232, %v2240
        %s2242 = scalar_lea.vmem [#allocation5], 192
        %v2243 = vld [vmem:[%s2242] sm:$0xf]
        %v2244 = vld [vmem:[%s2242 + $0x4] sm:$0xf]
        %v2245 = vld [vmem:[%s2242 + $0x8] sm:$0xf]
        %v2246 = vld [vmem:[%s2242 + $0xc] sm:$0xf]
        %v2247 = vld [vmem:[%s2242 + $0x10] sm:$0xf]
        %v2248 = vld [vmem:[%s2242 + $0x14] sm:$0xf]
        %v2249 = vld [vmem:[%s2242 + $0x18] sm:$0xf]
        %v2250 = vld [vmem:[%s2242 + $0x1c] sm:$0xf]
        %v2251 = vld [vmem:[%s2242 + $0x20] sm:$0xf]
        %v2252 = vld [vmem:[%s2242 + $0x24] sm:$0xf]
        %v2253 = vld [vmem:[%s2242 + $0x28] sm:$0xf]
        %v2254 = vld [vmem:[%s2242 + $0x2c] sm:$0xf]
        %v2255 = vld [vmem:[%s2242 + $0x30] sm:$0xf]
        %v2256 = vld [vmem:[%s2242 + $0x34] sm:$0xf]
        %v2257 = vld [vmem:[%s2242 + $0x38] sm:$0xf]
        %v2258 = vld [vmem:[%s2242 + $0x3c] sm:$0xf]
        %v2259 = vunpack.c.l.b16 %v1886
        %v2260 = vunpack.c.l.b16 %v1896
        %v2261 = vunpack.c.l.b16 %v1909
        %v2262 = vunpack.c.l.b16 %v1919
        %v2263 = vunpack.c.l.b16 %v1932
        %v2264 = vunpack.c.l.b16 %v1942
        %v2265 = vunpack.c.l.b16 %v1955
        %v2266 = vunpack.c.l.b16 %v1965
        %v2267 = vunpack.c.l.b16 %v1978
        %v2268 = vunpack.c.l.b16 %v1988
        %v2269 = vunpack.c.l.b16 %v2001
        %v2270 = vunpack.c.l.b16 %v2011
        %v2271 = vunpack.c.l.b16 %v2024
        %v2272 = vunpack.c.l.b16 %v2034
        %v2273 = vunpack.c.l.b16 %v2047
        %v2274 = vunpack.c.l.b16 %v2057
        %v2275 = vunpack.c.l.b16 %v2070
        %v2276 = vunpack.c.l.b16 %v2080
        %v2277 = vunpack.c.l.b16 %v2093
        %v2278 = vunpack.c.l.b16 %v2103
        %v2279 = vunpack.c.l.b16 %v2116
        %v2280 = vunpack.c.l.b16 %v2126
        %v2281 = vunpack.c.l.b16 %v2139
        %v2282 = vunpack.c.l.b16 %v2149
        %v2283 = vunpack.c.l.b16 %v2162
        %v2284 = vunpack.c.l.b16 %v2172
        %v2285 = vunpack.c.l.b16 %v2185
        %v2286 = vunpack.c.l.b16 %v2195
        %v2287 = vunpack.c.l.b16 %v2208
        %v2288 = vunpack.c.l.b16 %v2218
        %v2289 = vunpack.c.l.b16 %v2231
        %v2290 = vunpack.c.l.b16 %v2241
        %v2291 = vpack.c.b16 %v2260, %v2259
        %v2292 = vpack.c.b16 %v2262, %v2261
        %v2293 = vpack.c.b16 %v2264, %v2263
        %v2294 = vpack.c.b16 %v2266, %v2265
        %v2295 = vpack.c.b16 %v2268, %v2267
        %v2296 = vpack.c.b16 %v2270, %v2269
        %v2297 = vpack.c.b16 %v2272, %v2271
        %v2298 = vpack.c.b16 %v2274, %v2273
        %v2299 = vpack.c.b16 %v2276, %v2275
        %v2300 = vpack.c.b16 %v2278, %v2277
        %v2301 = vpack.c.b16 %v2280, %v2279
        %v2302 = vpack.c.b16 %v2282, %v2281
        %v2303 = vpack.c.b16 %v2284, %v2283
        %v2304 = vpack.c.b16 %v2286, %v2285
        %v2305 = vpack.c.b16 %v2288, %v2287
        %v2306 = vpack.c.b16 %v2290, %v2289
        %v2339 = vunpack.c.l.b16 %v2243
        %v2340 = vunpack.c.l.b16 %v2244
        %v2341 = vunpack.c.l.b16 %v2245
        %v2342 = vunpack.c.l.b16 %v2246
        %v2343 = vunpack.c.l.b16 %v2247
        %v2344 = vunpack.c.l.b16 %v2248
        %v2345 = vunpack.c.l.b16 %v2249
        %v2346 = vunpack.c.l.b16 %v2250
        %v2347 = vunpack.c.l.b16 %v2251
        %v2348 = vunpack.c.l.b16 %v2252
        %v2349 = vunpack.c.l.b16 %v2253
        %v2350 = vunpack.c.l.b16 %v2254
        %v2351 = vunpack.c.l.b16 %v2255
        %v2352 = vunpack.c.l.b16 %v2256
        %v2353 = vunpack.c.l.b16 %v2257
        %v2354 = vunpack.c.l.b16 %v2258
        %v2355 = vpack.c.b16 %v2340, %v2339
        %v2356 = vpack.c.b16 %v2342, %v2341
        %v2357 = vpack.c.b16 %v2344, %v2343
        %v2358 = vpack.c.b16 %v2346, %v2345
        %v2359 = vpack.c.b16 %v2348, %v2347
        %v2360 = vpack.c.b16 %v2350, %v2349
        %v2361 = vpack.c.b16 %v2352, %v2351
        %v2362 = vpack.c.b16 %v2354, %v2353
        %2371 = vmatprep.subr.bf16.mxu0 0
        %2372 = vmatpush1.bf16.msra.mxu0 %v2362
        %2373 = vmatprep.subr.bf16.mxu0 0
        %2374 = vmatpush1.bf16.msra.mxu0 %v2361
        %2375 = vmatprep.subr.bf16.mxu0 0
        %2376 = vmatpush1.bf16.msra.mxu0 %v2360
        %2377 = vmatprep.subr.bf16.mxu0 0
        %2378 = vmatpush1.bf16.msra.mxu0 %v2359
        %2379 = vmatprep.subr.bf16.mxu0 0
        %2380 = vmatpush1.bf16.msra.mxu0 %v2358
        %2381 = vmatprep.subr.bf16.mxu0 0
        %2382 = vmatpush1.bf16.msra.mxu0 %v2357
        %2383 = vmatprep.subr.bf16.mxu0 0
        %2384 = vmatpush1.bf16.msra.mxu0 %v2356
        %2385 = vmatprep.subr.bf16.mxu0 0
        %2386 = vmatpush1.bf16.msra.mxu0 %v2355
        %2387 = vmatprep.subr.bf16.mxu0 0
        %2388 = vmatpush2.bf16.msra.mxu0 0
        %2389 = vmatprep.subr.bf16.mxu0 0
        %2390 = vmatpush2.bf16.msra.mxu0 0
        %2391 = vmatprep.subr.bf16.mxu0 0
        %2392 = vmatpush2.bf16.msra.mxu0 0
        %2393 = vmatprep.subr.bf16.mxu0 0
        %2394 = vmatpush2.bf16.msra.mxu0 0
        %2395 = vmatprep.subr.bf16.mxu0 0
        %2396 = vmatpush2.bf16.msra.mxu0 0
        %2397 = vmatprep.subr.bf16.mxu0 0
        %2398 = vmatpush2.bf16.msra.mxu0 0
        %2399 = vmatprep.subr.bf16.mxu0 0
        %2400 = vmatpush2.bf16.msra.mxu0 0
        %2401 = vmatprep.subr.bf16.mxu0 0
        %2402 = vmatpush2.bf16.msra.mxu0 0
        %2403 = vmatprep.mubr.bf16.mxu0 0
        %2404 = vmatmul.mubr.bf16.gmra.mxu0 %v2291
        %v2405 = vpop.f32.mrf.mxu0
        %v2406 = vadd.f32 0.0, %v2405
        %v2407 = vpop.f32.mrf.mxu0
        %v2408 = vpop.f32.mrf.mxu0
        %v2409 = vadd.f32 0.0, %v2408
        %v2410 = vpop.f32.mrf.mxu0
        %2411 = vmatprep.mubr.bf16.mxu0 0
        %2412 = vmatmul.mubr.bf16.gmra.mxu0 %v2292
        %v2413 = vpop.f32.mrf.mxu0
        %v2414 = vadd.f32 0.0, %v2413
        %v2415 = vpop.f32.mrf.mxu0
        %v2416 = vpop.f32.mrf.mxu0
        %v2417 = vadd.f32 0.0, %v2416
        %v2418 = vpop.f32.mrf.mxu0
        %2419 = vmatprep.mubr.bf16.mxu0 0
        %2420 = vmatmul.mubr.bf16.gmra.mxu0 %v2293
        %v2421 = vpop.f32.mrf.mxu0
        %v2422 = vadd.f32 0.0, %v2421
        %v2423 = vpop.f32.mrf.mxu0
        %v2424 = vpop.f32.mrf.mxu0
        %v2425 = vadd.f32 0.0, %v2424
        %v2426 = vpop.f32.mrf.mxu0
        %2427 = vmatprep.mubr.bf16.mxu0 0
        %2428 = vmatmul.mubr.bf16.gmra.mxu0 %v2294
        %v2429 = vpop.f32.mrf.mxu0
        %v2430 = vadd.f32 0.0, %v2429
        %v2431 = vpop.f32.mrf.mxu0
        %v2432 = vpop.f32.mrf.mxu0
        %v2433 = vadd.f32 0.0, %v2432
        %v2434 = vpop.f32.mrf.mxu0
        %2435 = vmatprep.mubr.bf16.mxu0 0
        %2436 = vmatmul.mubr.bf16.gmra.mxu0 %v2295
        %v2437 = vpop.f32.mrf.mxu0
        %v2438 = vadd.f32 0.0, %v2437
        %v2439 = vpop.f32.mrf.mxu0
        %v2440 = vpop.f32.mrf.mxu0
        %v2441 = vadd.f32 0.0, %v2440
        %v2442 = vpop.f32.mrf.mxu0
        %2443 = vmatprep.mubr.bf16.mxu0 0
        %2444 = vmatmul.mubr.bf16.gmra.mxu0 %v2296
        %v2445 = vpop.f32.mrf.mxu0
        %v2446 = vadd.f32 0.0, %v2445
        %v2447 = vpop.f32.mrf.mxu0
        %v2448 = vpop.f32.mrf.mxu0
        %v2449 = vadd.f32 0.0, %v2448
        %v2450 = vpop.f32.mrf.mxu0
        %2451 = vmatprep.mubr.bf16.mxu0 0
        %2452 = vmatmul.mubr.bf16.gmra.mxu0 %v2297
        %v2453 = vpop.f32.mrf.mxu0
        %v2454 = vadd.f32 0.0, %v2453
        %v2455 = vpop.f32.mrf.mxu0
        %v2456 = vpop.f32.mrf.mxu0
        %v2457 = vadd.f32 0.0, %v2456
        %v2458 = vpop.f32.mrf.mxu0
        %2459 = vmatprep.mubr.bf16.mxu0 0
        %2460 = vmatmul.mubr.bf16.gmra.mxu0 %v2298
        %v2461 = vpop.f32.mrf.mxu0
        %v2462 = vadd.f32 0.0, %v2461
        %v2463 = vpop.f32.mrf.mxu0
        %v2464 = vpop.f32.mrf.mxu0
        %v2465 = vadd.f32 0.0, %v2464
        %v2466 = vpop.f32.mrf.mxu0
        %2467 = vmatprep.mubr.bf16.mxu0 0
        %2468 = vmatmul.mubr.bf16.gmra.mxu0 %v2299
        %v2469 = vpop.f32.mrf.mxu0
        %v2470 = vadd.f32 0.0, %v2469
        %v2471 = vpop.f32.mrf.mxu0
        %v2472 = vpop.f32.mrf.mxu0
        %v2473 = vadd.f32 0.0, %v2472
        %v2474 = vpop.f32.mrf.mxu0
        %2475 = vmatprep.mubr.bf16.mxu0 0
        %2476 = vmatmul.mubr.bf16.gmra.mxu0 %v2300
        %v2477 = vpop.f32.mrf.mxu0
        %v2478 = vadd.f32 0.0, %v2477
        %v2479 = vpop.f32.mrf.mxu0
        %v2480 = vpop.f32.mrf.mxu0
        %v2481 = vadd.f32 0.0, %v2480
        %v2482 = vpop.f32.mrf.mxu0
        %2483 = vmatprep.mubr.bf16.mxu0 0
        %2484 = vmatmul.mubr.bf16.gmra.mxu0 %v2301
        %v2485 = vpop.f32.mrf.mxu0
        %v2486 = vadd.f32 0.0, %v2485
        %v2487 = vpop.f32.mrf.mxu0
        %v2488 = vpop.f32.mrf.mxu0
        %v2489 = vadd.f32 0.0, %v2488
        %v2490 = vpop.f32.mrf.mxu0
        %2491 = vmatprep.mubr.bf16.mxu0 0
        %2492 = vmatmul.mubr.bf16.gmra.mxu0 %v2302
        %v2493 = vpop.f32.mrf.mxu0
        %v2494 = vadd.f32 0.0, %v2493
        %v2495 = vpop.f32.mrf.mxu0
        %v2496 = vpop.f32.mrf.mxu0
        %v2497 = vadd.f32 0.0, %v2496
        %v2498 = vpop.f32.mrf.mxu0
        %2499 = vmatprep.mubr.bf16.mxu0 0
        %2500 = vmatmul.mubr.bf16.gmra.mxu0 %v2303
        %v2501 = vpop.f32.mrf.mxu0
        %v2502 = vadd.f32 0.0, %v2501
        %v2503 = vpop.f32.mrf.mxu0
        %v2504 = vpop.f32.mrf.mxu0
        %v2505 = vadd.f32 0.0, %v2504
        %v2506 = vpop.f32.mrf.mxu0
        %2507 = vmatprep.mubr.bf16.mxu0 0
        %2508 = vmatmul.mubr.bf16.gmra.mxu0 %v2304
        %v2509 = vpop.f32.mrf.mxu0
        %v2510 = vadd.f32 0.0, %v2509
        %v2511 = vpop.f32.mrf.mxu0
        %v2512 = vpop.f32.mrf.mxu0
        %v2513 = vadd.f32 0.0, %v2512
        %v2514 = vpop.f32.mrf.mxu0
        %2515 = vmatprep.mubr.bf16.mxu0 0
        %2516 = vmatmul.mubr.bf16.gmra.mxu0 %v2305
        %v2517 = vpop.f32.mrf.mxu0
        %v2518 = vadd.f32 0.0, %v2517
        %v2519 = vpop.f32.mrf.mxu0
        %v2520 = vpop.f32.mrf.mxu0
        %v2521 = vadd.f32 0.0, %v2520
        %v2522 = vpop.f32.mrf.mxu0
        %2523 = vmatprep.mubr.bf16.mxu0 0
        %2524 = vmatmul.mubr.bf16.gmra.mxu0 %v2306
        %v2525 = vpop.f32.mrf.mxu0
        %v2526 = vadd.f32 0.0, %v2525
        %v2527 = vpop.f32.mrf.mxu0
        %v2528 = vpop.f32.mrf.mxu0
        %v2529 = vadd.f32 0.0, %v2528
        %v2530 = vpop.f32.mrf.mxu0
        %2531 = vdwg.mxu0
        %v2532 = vadd.f32 %v1823, %v2406
        %v2533 = vadd.f32 %v1824, %v2409
        %v2534 = vadd.f32 %v1825, %v2414
        %v2535 = vadd.f32 %v1826, %v2417
        %v2536 = vadd.f32 %v1827, %v2422
        %v2537 = vadd.f32 %v1828, %v2425
        %v2538 = vadd.f32 %v1829, %v2430
        %v2539 = vadd.f32 %v1830, %v2433
        %v2540 = vadd.f32 %v1831, %v2438
        %v2541 = vadd.f32 %v1832, %v2441
        %v2542 = vadd.f32 %v1833, %v2446
        %v2543 = vadd.f32 %v1834, %v2449
        %v2544 = vadd.f32 %v1835, %v2454
        %v2545 = vadd.f32 %v1836, %v2457
        %v2546 = vadd.f32 %v1837, %v2462
        %v2547 = vadd.f32 %v1838, %v2465
        %v2548 = vadd.f32 %v1839, %v2470
        %v2549 = vadd.f32 %v1840, %v2473
        %v2550 = vadd.f32 %v1841, %v2478
        %v2551 = vadd.f32 %v1842, %v2481
        %v2552 = vadd.f32 %v1843, %v2486
        %v2553 = vadd.f32 %v1844, %v2489
        %v2554 = vadd.f32 %v1845, %v2494
        %v2555 = vadd.f32 %v1846, %v2497
        %v2556 = vadd.f32 %v1847, %v2502
        %v2557 = vadd.f32 %v1848, %v2505
        %v2558 = vadd.f32 %v1849, %v2510
        %v2559 = vadd.f32 %v1850, %v2513
        %v2560 = vadd.f32 %v1851, %v2518
        %v2561 = vadd.f32 %v1852, %v2521
        %v2562 = vadd.f32 %v1853, %v2526
        %v2563 = vadd.f32 %v1854, %v2529
        %v2564 = vld [vmem:[%s238] sm:$0xc]
        %v2565 = vld [vmem:[%s238 + $0xc] sm:$0xc]
        %v2566 = vld [vmem:[%s238 + $0x18] sm:$0xc]
        %v2567 = vld [vmem:[%s238 + $0x24] sm:$0xc]
        %v2568 = vld [vmem:[%s238 + $0x30] sm:$0xc]
        %v2569 = vld [vmem:[%s238 + $0x3c] sm:$0xc]
        %v2570 = vld [vmem:[%s238 + $0x48] sm:$0xc]
        %v2571 = vld [vmem:[%s238 + $0x54] sm:$0xc]
        %v2572 = vld [vmem:[%s238 + $0x60] sm:$0xc]
        %v2573 = vld [vmem:[%s238 + $0x6c] sm:$0xc]
        %v2574 = vld [vmem:[%s238 + $0x78] sm:$0xc]
        %v2575 = vld [vmem:[%s238 + $0x84] sm:$0xc]
        %v2576 = vld [vmem:[%s238 + $0x90] sm:$0xc]
        %v2577 = vld [vmem:[%s238 + $0x9c] sm:$0xc]
        %v2578 = vld [vmem:[%s238 + $0xa8] sm:$0xc]
        %v2579 = vld [vmem:[%s238 + $0xb4] sm:$0xc]
        %vm2612 = vcmask 1041408
        %vm2613 = vcmask 1045508
        %vm2614 = vmor %vm2612, %vm2613
        %v2615 = vrot.slane %v2564, 6
        %v2616 = vrot.slane %v2615, 4
        %v2617 = vrot.slane %v325, 6
        %v2618 = vsel %vm2614, %v2616, %v2617
        %v2619 = vrot.slane %v2617, 4
        %v2620 = vrot.slane %v1855, 6
        %v2621 = vsel %vm2614, %v2619, %v2620
        %v2622 = vrot.slane %v2565, 6
        %v2623 = vrot.slane %v2622, 4
        %v2624 = vrot.slane %v328, 6
        %v2625 = vsel %vm2614, %v2623, %v2624
        %v2626 = vrot.slane %v2624, 4
        %v2627 = vrot.slane %v1856, 6
        %v2628 = vsel %vm2614, %v2626, %v2627
        %v2629 = vrot.slane %v2566, 6
        %v2630 = vrot.slane %v2629, 4
        %v2631 = vrot.slane %v331, 6
        %v2632 = vsel %vm2614, %v2630, %v2631
        %v2633 = vrot.slane %v2631, 4
        %v2634 = vrot.slane %v1857, 6
        %v2635 = vsel %vm2614, %v2633, %v2634
        %v2636 = vrot.slane %v2567, 6
        %v2637 = vrot.slane %v2636, 4
        %v2638 = vrot.slane %v334, 6
        %v2639 = vsel %vm2614, %v2637, %v2638
        %v2640 = vrot.slane %v2638, 4
        %v2641 = vrot.slane %v1858, 6
        %v2642 = vsel %vm2614, %v2640, %v2641
        %v2643 = vrot.slane %v2568, 6
        %v2644 = vrot.slane %v2643, 4
        %v2645 = vrot.slane %v337, 6
        %v2646 = vsel %vm2614, %v2644, %v2645
        %v2647 = vrot.slane %v2645, 4
        %v2648 = vrot.slane %v1859, 6
        %v2649 = vsel %vm2614, %v2647, %v2648
        %v2650 = vrot.slane %v2569, 6
        %v2651 = vrot.slane %v2650, 4
        %v2652 = vrot.slane %v340, 6
        %v2653 = vsel %vm2614, %v2651, %v2652
        %v2654 = vrot.slane %v2652, 4
        %v2655 = vrot.slane %v1860, 6
        %v2656 = vsel %vm2614, %v2654, %v2655
        %v2657 = vrot.slane %v2570, 6
        %v2658 = vrot.slane %v2657, 4
        %v2659 = vrot.slane %v343, 6
        %v2660 = vsel %vm2614, %v2658, %v2659
        %v2661 = vrot.slane %v2659, 4
        %v2662 = vrot.slane %v1861, 6
        %v2663 = vsel %vm2614, %v2661, %v2662
        %v2664 = vrot.slane %v2571, 6
        %v2665 = vrot.slane %v2664, 4
        %v2666 = vrot.slane %v346, 6
        %v2667 = vsel %vm2614, %v2665, %v2666
        %v2668 = vrot.slane %v2666, 4
        %v2669 = vrot.slane %v1862, 6
        %v2670 = vsel %vm2614, %v2668, %v2669
        %v2671 = vrot.slane %v2572, 6
        %v2672 = vrot.slane %v2671, 4
        %v2673 = vrot.slane %v349, 6
        %v2674 = vsel %vm2614, %v2672, %v2673
        %v2675 = vrot.slane %v2673, 4
        %v2676 = vrot.slane %v1863, 6
        %v2677 = vsel %vm2614, %v2675, %v2676
        %v2678 = vrot.slane %v2573, 6
        %v2679 = vrot.slane %v2678, 4
        %v2680 = vrot.slane %v352, 6
        %v2681 = vsel %vm2614, %v2679, %v2680
        %v2682 = vrot.slane %v2680, 4
        %v2683 = vrot.slane %v1864, 6
        %v2684 = vsel %vm2614, %v2682, %v2683
        %v2685 = vrot.slane %v2574, 6
        %v2686 = vrot.slane %v2685, 4
        %v2687 = vrot.slane %v355, 6
        %v2688 = vsel %vm2614, %v2686, %v2687
        %v2689 = vrot.slane %v2687, 4
        %v2690 = vrot.slane %v1865, 6
        %v2691 = vsel %vm2614, %v2689, %v2690
        %v2692 = vrot.slane %v2575, 6
        %v2693 = vrot.slane %v2692, 4
        %v2694 = vrot.slane %v358, 6
        %v2695 = vsel %vm2614, %v2693, %v2694
        %v2696 = vrot.slane %v2694, 4
        %v2697 = vrot.slane %v1866, 6
        %v2698 = vsel %vm2614, %v2696, %v2697
        %v2699 = vrot.slane %v2576, 6
        %v2700 = vrot.slane %v2699, 4
        %v2701 = vrot.slane %v361, 6
        %v2702 = vsel %vm2614, %v2700, %v2701
        %v2703 = vrot.slane %v2701, 4
        %v2704 = vrot.slane %v1867, 6
        %v2705 = vsel %vm2614, %v2703, %v2704
        %v2706 = vrot.slane %v2577, 6
        %v2707 = vrot.slane %v2706, 4
        %v2708 = vrot.slane %v364, 6
        %v2709 = vsel %vm2614, %v2707, %v2708
        %v2710 = vrot.slane %v2708, 4
        %v2711 = vrot.slane %v1868, 6
        %v2712 = vsel %vm2614, %v2710, %v2711
        %v2713 = vrot.slane %v2578, 6
        %v2714 = vrot.slane %v2713, 4
        %v2715 = vrot.slane %v367, 6
        %v2716 = vsel %vm2614, %v2714, %v2715
        %v2717 = vrot.slane %v2715, 4
        %v2718 = vrot.slane %v1869, 6
        %v2719 = vsel %vm2614, %v2717, %v2718
        %v2720 = vrot.slane %v2579, 6
        %v2721 = vrot.slane %v2720, 4
        %v2722 = vrot.slane %v370, 6
        %v2723 = vsel %vm2614, %v2721, %v2722
        %v2724 = vrot.slane %v2722, 4
        %v2725 = vrot.slane %v1870, 6
        %v2726 = vsel %vm2614, %v2724, %v2725
        %s2727 = scalar_lea.vmem [#allocation5], 256
        %v2728 = vld [vmem:[%s2727] sm:$0xf]
        %v2729 = vld [vmem:[%s2727 + $0x4] sm:$0xf]
        %v2730 = vld [vmem:[%s2727 + $0x8] sm:$0xf]
        %v2731 = vld [vmem:[%s2727 + $0xc] sm:$0xf]
        %v2732 = vld [vmem:[%s2727 + $0x10] sm:$0xf]
        %v2733 = vld [vmem:[%s2727 + $0x14] sm:$0xf]
        %v2734 = vld [vmem:[%s2727 + $0x18] sm:$0xf]
        %v2735 = vld [vmem:[%s2727 + $0x1c] sm:$0xf]
        %v2736 = vld [vmem:[%s2727 + $0x20] sm:$0xf]
        %v2737 = vld [vmem:[%s2727 + $0x24] sm:$0xf]
        %v2738 = vld [vmem:[%s2727 + $0x28] sm:$0xf]
        %v2739 = vld [vmem:[%s2727 + $0x2c] sm:$0xf]
        %v2740 = vld [vmem:[%s2727 + $0x30] sm:$0xf]
        %v2741 = vld [vmem:[%s2727 + $0x34] sm:$0xf]
        %v2742 = vld [vmem:[%s2727 + $0x38] sm:$0xf]
        %v2743 = vld [vmem:[%s2727 + $0x3c] sm:$0xf]
        %v2744 = vunpack.c.l.b16 %v2618
        %v2745 = vunpack.c.l.b16 %v2621
        %v2746 = vunpack.c.l.b16 %v2625
        %v2747 = vunpack.c.l.b16 %v2628
        %v2748 = vunpack.c.l.b16 %v2632
        %v2749 = vunpack.c.l.b16 %v2635
        %v2750 = vunpack.c.l.b16 %v2639
        %v2751 = vunpack.c.l.b16 %v2642
        %v2752 = vunpack.c.l.b16 %v2646
        %v2753 = vunpack.c.l.b16 %v2649
        %v2754 = vunpack.c.l.b16 %v2653
        %v2755 = vunpack.c.l.b16 %v2656
        %v2756 = vunpack.c.l.b16 %v2660
        %v2757 = vunpack.c.l.b16 %v2663
        %v2758 = vunpack.c.l.b16 %v2667
        %v2759 = vunpack.c.l.b16 %v2670
        %v2760 = vunpack.c.l.b16 %v2674
        %v2761 = vunpack.c.l.b16 %v2677
        %v2762 = vunpack.c.l.b16 %v2681
        %v2763 = vunpack.c.l.b16 %v2684
        %v2764 = vunpack.c.l.b16 %v2688
        %v2765 = vunpack.c.l.b16 %v2691
        %v2766 = vunpack.c.l.b16 %v2695
        %v2767 = vunpack.c.l.b16 %v2698
        %v2768 = vunpack.c.l.b16 %v2702
        %v2769 = vunpack.c.l.b16 %v2705
        %v2770 = vunpack.c.l.b16 %v2709
        %v2771 = vunpack.c.l.b16 %v2712
        %v2772 = vunpack.c.l.b16 %v2716
        %v2773 = vunpack.c.l.b16 %v2719
        %v2774 = vunpack.c.l.b16 %v2723
        %v2775 = vunpack.c.l.b16 %v2726
        %v2776 = vpack.c.b16 %v2745, %v2744
        %v2777 = vpack.c.b16 %v2747, %v2746
        %v2778 = vpack.c.b16 %v2749, %v2748
        %v2779 = vpack.c.b16 %v2751, %v2750
        %v2780 = vpack.c.b16 %v2753, %v2752
        %v2781 = vpack.c.b16 %v2755, %v2754
        %v2782 = vpack.c.b16 %v2757, %v2756
        %v2783 = vpack.c.b16 %v2759, %v2758
        %v2784 = vpack.c.b16 %v2761, %v2760
        %v2785 = vpack.c.b16 %v2763, %v2762
        %v2786 = vpack.c.b16 %v2765, %v2764
        %v2787 = vpack.c.b16 %v2767, %v2766
        %v2788 = vpack.c.b16 %v2769, %v2768
        %v2789 = vpack.c.b16 %v2771, %v2770
        %v2790 = vpack.c.b16 %v2773, %v2772
        %v2791 = vpack.c.b16 %v2775, %v2774
        %v2824 = vunpack.c.l.b16 %v2728
        %v2825 = vunpack.c.l.b16 %v2729
        %v2826 = vunpack.c.l.b16 %v2730
        %v2827 = vunpack.c.l.b16 %v2731
        %v2828 = vunpack.c.l.b16 %v2732
        %v2829 = vunpack.c.l.b16 %v2733
        %v2830 = vunpack.c.l.b16 %v2734
        %v2831 = vunpack.c.l.b16 %v2735
        %v2832 = vunpack.c.l.b16 %v2736
        %v2833 = vunpack.c.l.b16 %v2737
        %v2834 = vunpack.c.l.b16 %v2738
        %v2835 = vunpack.c.l.b16 %v2739
        %v2836 = vunpack.c.l.b16 %v2740
        %v2837 = vunpack.c.l.b16 %v2741
        %v2838 = vunpack.c.l.b16 %v2742
        %v2839 = vunpack.c.l.b16 %v2743
        %v2840 = vpack.c.b16 %v2825, %v2824
        %v2841 = vpack.c.b16 %v2827, %v2826
        %v2842 = vpack.c.b16 %v2829, %v2828
        %v2843 = vpack.c.b16 %v2831, %v2830
        %v2844 = vpack.c.b16 %v2833, %v2832
        %v2845 = vpack.c.b16 %v2835, %v2834
        %v2846 = vpack.c.b16 %v2837, %v2836
        %v2847 = vpack.c.b16 %v2839, %v2838
        %2856 = vmatprep.subr.bf16.mxu0 0
        %2857 = vmatpush1.bf16.msra.mxu0 %v2847
        %2858 = vmatprep.subr.bf16.mxu0 0
        %2859 = vmatpush1.bf16.msra.mxu0 %v2846
        %2860 = vmatprep.subr.bf16.mxu0 0
        %2861 = vmatpush1.bf16.msra.mxu0 %v2845
        %2862 = vmatprep.subr.bf16.mxu0 0
        %2863 = vmatpush1.bf16.msra.mxu0 %v2844
        %2864 = vmatprep.subr.bf16.mxu0 0
        %2865 = vmatpush1.bf16.msra.mxu0 %v2843
        %2866 = vmatprep.subr.bf16.mxu0 0
        %2867 = vmatpush1.bf16.msra.mxu0 %v2842
        %2868 = vmatprep.subr.bf16.mxu0 0
        %2869 = vmatpush1.bf16.msra.mxu0 %v2841
        %2870 = vmatprep.subr.bf16.mxu0 0
        %2871 = vmatpush1.bf16.msra.mxu0 %v2840
        %2872 = vmatprep.subr.bf16.mxu0 0
        %2873 = vmatpush2.bf16.msra.mxu0 0
        %2874 = vmatprep.subr.bf16.mxu0 0
        %2875 = vmatpush2.bf16.msra.mxu0 0
        %2876 = vmatprep.subr.bf16.mxu0 0
        %2877 = vmatpush2.bf16.msra.mxu0 0
        %2878 = vmatprep.subr.bf16.mxu0 0
        %2879 = vmatpush2.bf16.msra.mxu0 0
        %2880 = vmatprep.subr.bf16.mxu0 0
        %2881 = vmatpush2.bf16.msra.mxu0 0
        %2882 = vmatprep.subr.bf16.mxu0 0
        %2883 = vmatpush2.bf16.msra.mxu0 0
        %2884 = vmatprep.subr.bf16.mxu0 0
        %2885 = vmatpush2.bf16.msra.mxu0 0
        %2886 = vmatprep.subr.bf16.mxu0 0
        %2887 = vmatpush2.bf16.msra.mxu0 0
        %2888 = vmatprep.mubr.bf16.mxu0 0
        %2889 = vmatmul.mubr.bf16.gmra.mxu0 %v2776
        %v2890 = vpop.f32.mrf.mxu0
        %v2891 = vadd.f32 0.0, %v2890
        %v2892 = vpop.f32.mrf.mxu0
        %v2893 = vpop.f32.mrf.mxu0
        %v2894 = vadd.f32 0.0, %v2893
        %v2895 = vpop.f32.mrf.mxu0
        %2896 = vmatprep.mubr.bf16.mxu0 0
        %2897 = vmatmul.mubr.bf16.gmra.mxu0 %v2777
        %v2898 = vpop.f32.mrf.mxu0
        %v2899 = vadd.f32 0.0, %v2898
        %v2900 = vpop.f32.mrf.mxu0
        %v2901 = vpop.f32.mrf.mxu0
        %v2902 = vadd.f32 0.0, %v2901
        %v2903 = vpop.f32.mrf.mxu0
        %2904 = vmatprep.mubr.bf16.mxu0 0
        %2905 = vmatmul.mubr.bf16.gmra.mxu0 %v2778
        %v2906 = vpop.f32.mrf.mxu0
        %v2907 = vadd.f32 0.0, %v2906
        %v2908 = vpop.f32.mrf.mxu0
        %v2909 = vpop.f32.mrf.mxu0
        %v2910 = vadd.f32 0.0, %v2909
        %v2911 = vpop.f32.mrf.mxu0
        %2912 = vmatprep.mubr.bf16.mxu0 0
        %2913 = vmatmul.mubr.bf16.gmra.mxu0 %v2779
        %v2914 = vpop.f32.mrf.mxu0
        %v2915 = vadd.f32 0.0, %v2914
        %v2916 = vpop.f32.mrf.mxu0
        %v2917 = vpop.f32.mrf.mxu0
        %v2918 = vadd.f32 0.0, %v2917
        %v2919 = vpop.f32.mrf.mxu0
        %2920 = vmatprep.mubr.bf16.mxu0 0
        %2921 = vmatmul.mubr.bf16.gmra.mxu0 %v2780
        %v2922 = vpop.f32.mrf.mxu0
        %v2923 = vadd.f32 0.0, %v2922
        %v2924 = vpop.f32.mrf.mxu0
        %v2925 = vpop.f32.mrf.mxu0
        %v2926 = vadd.f32 0.0, %v2925
        %v2927 = vpop.f32.mrf.mxu0
        %2928 = vmatprep.mubr.bf16.mxu0 0
        %2929 = vmatmul.mubr.bf16.gmra.mxu0 %v2781
        %v2930 = vpop.f32.mrf.mxu0
        %v2931 = vadd.f32 0.0, %v2930
        %v2932 = vpop.f32.mrf.mxu0
        %v2933 = vpop.f32.mrf.mxu0
        %v2934 = vadd.f32 0.0, %v2933
        %v2935 = vpop.f32.mrf.mxu0
        %2936 = vmatprep.mubr.bf16.mxu0 0
        %2937 = vmatmul.mubr.bf16.gmra.mxu0 %v2782
        %v2938 = vpop.f32.mrf.mxu0
        %v2939 = vadd.f32 0.0, %v2938
        %v2940 = vpop.f32.mrf.mxu0
        %v2941 = vpop.f32.mrf.mxu0
        %v2942 = vadd.f32 0.0, %v2941
        %v2943 = vpop.f32.mrf.mxu0
        %2944 = vmatprep.mubr.bf16.mxu0 0
        %2945 = vmatmul.mubr.bf16.gmra.mxu0 %v2783
        %v2946 = vpop.f32.mrf.mxu0
        %v2947 = vadd.f32 0.0, %v2946
        %v2948 = vpop.f32.mrf.mxu0
        %v2949 = vpop.f32.mrf.mxu0
        %v2950 = vadd.f32 0.0, %v2949
        %v2951 = vpop.f32.mrf.mxu0
        %2952 = vmatprep.mubr.bf16.mxu0 0
        %2953 = vmatmul.mubr.bf16.gmra.mxu0 %v2784
        %v2954 = vpop.f32.mrf.mxu0
        %v2955 = vadd.f32 0.0, %v2954
        %v2956 = vpop.f32.mrf.mxu0
        %v2957 = vpop.f32.mrf.mxu0
        %v2958 = vadd.f32 0.0, %v2957
        %v2959 = vpop.f32.mrf.mxu0
        %2960 = vmatprep.mubr.bf16.mxu0 0
        %2961 = vmatmul.mubr.bf16.gmra.mxu0 %v2785
        %v2962 = vpop.f32.mrf.mxu0
        %v2963 = vadd.f32 0.0, %v2962
        %v2964 = vpop.f32.mrf.mxu0
        %v2965 = vpop.f32.mrf.mxu0
        %v2966 = vadd.f32 0.0, %v2965
        %v2967 = vpop.f32.mrf.mxu0
        %2968 = vmatprep.mubr.bf16.mxu0 0
        %2969 = vmatmul.mubr.bf16.gmra.mxu0 %v2786
        %v2970 = vpop.f32.mrf.mxu0
        %v2971 = vadd.f32 0.0, %v2970
        %v2972 = vpop.f32.mrf.mxu0
        %v2973 = vpop.f32.mrf.mxu0
        %v2974 = vadd.f32 0.0, %v2973
        %v2975 = vpop.f32.mrf.mxu0
        %2976 = vmatprep.mubr.bf16.mxu0 0
        %2977 = vmatmul.mubr.bf16.gmra.mxu0 %v2787
        %v2978 = vpop.f32.mrf.mxu0
        %v2979 = vadd.f32 0.0, %v2978
        %v2980 = vpop.f32.mrf.mxu0
        %v2981 = vpop.f32.mrf.mxu0
        %v2982 = vadd.f32 0.0, %v2981
        %v2983 = vpop.f32.mrf.mxu0
        %2984 = vmatprep.mubr.bf16.mxu0 0
        %2985 = vmatmul.mubr.bf16.gmra.mxu0 %v2788
        %v2986 = vpop.f32.mrf.mxu0
        %v2987 = vadd.f32 0.0, %v2986
        %v2988 = vpop.f32.mrf.mxu0
        %v2989 = vpop.f32.mrf.mxu0
        %v2990 = vadd.f32 0.0, %v2989
        %v2991 = vpop.f32.mrf.mxu0
        %2992 = vmatprep.mubr.bf16.mxu0 0
        %2993 = vmatmul.mubr.bf16.gmra.mxu0 %v2789
        %v2994 = vpop.f32.mrf.mxu0
        %v2995 = vadd.f32 0.0, %v2994
        %v2996 = vpop.f32.mrf.mxu0
        %v2997 = vpop.f32.mrf.mxu0
        %v2998 = vadd.f32 0.0, %v2997
        %v2999 = vpop.f32.mrf.mxu0
        %3000 = vmatprep.mubr.bf16.mxu0 0
        %3001 = vmatmul.mubr.bf16.gmra.mxu0 %v2790
        %v3002 = vpop.f32.mrf.mxu0
        %v3003 = vadd.f32 0.0, %v3002
        %v3004 = vpop.f32.mrf.mxu0
        %v3005 = vpop.f32.mrf.mxu0
        %v3006 = vadd.f32 0.0, %v3005
        %v3007 = vpop.f32.mrf.mxu0
        %3008 = vmatprep.mubr.bf16.mxu0 0
        %3009 = vmatmul.mubr.bf16.gmra.mxu0 %v2791
        %v3010 = vpop.f32.mrf.mxu0
        %v3011 = vadd.f32 0.0, %v3010
        %v3012 = vpop.f32.mrf.mxu0
        %v3013 = vpop.f32.mrf.mxu0
        %v3014 = vadd.f32 0.0, %v3013
        %v3015 = vpop.f32.mrf.mxu0
        %3016 = vdwg.mxu0
        %v3017 = vadd.f32 %v2532, %v2891
        %v3018 = vadd.f32 %v2533, %v2894
        %v3019 = vadd.f32 %v2534, %v2899
        %v3020 = vadd.f32 %v2535, %v2902
        %v3021 = vadd.f32 %v2536, %v2907
        %v3022 = vadd.f32 %v2537, %v2910
        %v3023 = vadd.f32 %v2538, %v2915
        %v3024 = vadd.f32 %v2539, %v2918
        %v3025 = vadd.f32 %v2540, %v2923
        %v3026 = vadd.f32 %v2541, %v2926
        %v3027 = vadd.f32 %v2542, %v2931
        %v3028 = vadd.f32 %v2543, %v2934
        %v3029 = vadd.f32 %v2544, %v2939
        %v3030 = vadd.f32 %v2545, %v2942
        %v3031 = vadd.f32 %v2546, %v2947
        %v3032 = vadd.f32 %v2547, %v2950
        %v3033 = vadd.f32 %v2548, %v2955
        %v3034 = vadd.f32 %v2549, %v2958
        %v3035 = vadd.f32 %v2550, %v2963
        %v3036 = vadd.f32 %v2551, %v2966
        %v3037 = vadd.f32 %v2552, %v2971
        %v3038 = vadd.f32 %v2553, %v2974
        %v3039 = vadd.f32 %v2554, %v2979
        %v3040 = vadd.f32 %v2555, %v2982
        %v3041 = vadd.f32 %v2556, %v2987
        %v3042 = vadd.f32 %v2557, %v2990
        %v3043 = vadd.f32 %v2558, %v2995
        %v3044 = vadd.f32 %v2559, %v2998
        %v3045 = vadd.f32 %v2560, %v3003
        %v3046 = vadd.f32 %v2561, %v3006
        %v3047 = vadd.f32 %v2562, %v3011
        %v3048 = vadd.f32 %v2563, %v3014
        %v3049 = vlaneseq
        %v3050 = vshrl.u32 %v3049, 7
        %v3051 = vadd.s32 %v3050, 8
        %vm3052 = vcmp.lt.s32.totalorder %v3050, 12
        %vm3053 = vcmp.lt.s32.totalorder %v3051, 12
        %v3054 = vsel %vm3052, 0.0, -1e+30
        %v3055 = vsel %vm3053, 0.0, -1e+30
        %v3056 = vadd.f32 %v3017, %v3054
        %v3057 = vadd.f32 %v3018, %v3055
        %v3058 = vadd.f32 %v3019, %v3054
        %v3059 = vadd.f32 %v3020, %v3055
        %v3060 = vadd.f32 %v3021, %v3054
        %v3061 = vadd.f32 %v3022, %v3055
        %v3062 = vadd.f32 %v3023, %v3054
        %v3063 = vadd.f32 %v3024, %v3055
        %v3064 = vadd.f32 %v3025, %v3054
        %v3065 = vadd.f32 %v3026, %v3055
        %v3066 = vadd.f32 %v3027, %v3054
        %v3067 = vadd.f32 %v3028, %v3055
        %v3068 = vadd.f32 %v3029, %v3054
        %v3069 = vadd.f32 %v3030, %v3055
        %v3070 = vadd.f32 %v3031, %v3054
        %v3071 = vadd.f32 %v3032, %v3055
        %v3072 = vadd.f32 %v3033, %v3054
        %v3073 = vadd.f32 %v3034, %v3055
        %v3074 = vadd.f32 %v3035, %v3054
        %v3075 = vadd.f32 %v3036, %v3055
        %v3076 = vadd.f32 %v3037, %v3054
        %v3077 = vadd.f32 %v3038, %v3055
        %v3078 = vadd.f32 %v3039, %v3054
        %v3079 = vadd.f32 %v3040, %v3055
        %v3080 = vadd.f32 %v3041, %v3054
        %v3081 = vadd.f32 %v3042, %v3055
        %v3082 = vadd.f32 %v3043, %v3054
        %v3083 = vadd.f32 %v3044, %v3055
        %v3084 = vadd.f32 %v3045, %v3054
        %v3085 = vadd.f32 %v3046, %v3055
        %v3086 = vadd.f32 %v3047, %v3054
        %v3087 = vadd.f32 %v3048, %v3055
        %v3088 = vmax.f32 %v3056, %v3057
        %v3089 = vrot.slane %v3088, 4
        %v3090 = vmax.f32 %v3088, %v3089
        %v3091 = vrot.slane %v3090, 2
        %v3092 = vmax.f32 %v3090, %v3091
        %v3093 = vrot.slane %v3092, 1
        %v3094 = vmax.f32 %v3092, %v3093
        %v3095 = vmax.f32 %v3058, %v3059
        %v3096 = vrot.slane %v3095, 4
        %v3097 = vmax.f32 %v3095, %v3096
        %v3098 = vrot.slane %v3097, 2
        %v3099 = vmax.f32 %v3097, %v3098
        %v3100 = vrot.slane %v3099, 1
        %v3101 = vmax.f32 %v3099, %v3100
        %v3102 = vmax.f32 %v3060, %v3061
        %v3103 = vrot.slane %v3102, 4
        %v3104 = vmax.f32 %v3102, %v3103
        %v3105 = vrot.slane %v3104, 2
        %v3106 = vmax.f32 %v3104, %v3105
        %v3107 = vrot.slane %v3106, 1
        %v3108 = vmax.f32 %v3106, %v3107
        %v3109 = vmax.f32 %v3062, %v3063
        %v3110 = vrot.slane %v3109, 4
        %v3111 = vmax.f32 %v3109, %v3110
        %v3112 = vrot.slane %v3111, 2
        %v3113 = vmax.f32 %v3111, %v3112
        %v3114 = vrot.slane %v3113, 1
        %v3115 = vmax.f32 %v3113, %v3114
        %v3116 = vmax.f32 %v3064, %v3065
        %v3117 = vrot.slane %v3116, 4
        %v3118 = vmax.f32 %v3116, %v3117
        %v3119 = vrot.slane %v3118, 2
        %v3120 = vmax.f32 %v3118, %v3119
        %v3121 = vrot.slane %v3120, 1
        %v3122 = vmax.f32 %v3120, %v3121
        %v3123 = vmax.f32 %v3066, %v3067
        %v3124 = vrot.slane %v3123, 4
        %v3125 = vmax.f32 %v3123, %v3124
        %v3126 = vrot.slane %v3125, 2
        %v3127 = vmax.f32 %v3125, %v3126
        %v3128 = vrot.slane %v3127, 1
        %v3129 = vmax.f32 %v3127, %v3128
        %v3130 = vmax.f32 %v3068, %v3069
        %v3131 = vrot.slane %v3130, 4
        %v3132 = vmax.f32 %v3130, %v3131
        %v3133 = vrot.slane %v3132, 2
        %v3134 = vmax.f32 %v3132, %v3133
        %v3135 = vrot.slane %v3134, 1
        %v3136 = vmax.f32 %v3134, %v3135
        %v3137 = vmax.f32 %v3070, %v3071
        %v3138 = vrot.slane %v3137, 4
        %v3139 = vmax.f32 %v3137, %v3138
        %v3140 = vrot.slane %v3139, 2
        %v3141 = vmax.f32 %v3139, %v3140
        %v3142 = vrot.slane %v3141, 1
        %v3143 = vmax.f32 %v3141, %v3142
        %v3144 = vmax.f32 %v3072, %v3073
        %v3145 = vrot.slane %v3144, 4
        %v3146 = vmax.f32 %v3144, %v3145
        %v3147 = vrot.slane %v3146, 2
        %v3148 = vmax.f32 %v3146, %v3147
        %v3149 = vrot.slane %v3148, 1
        %v3150 = vmax.f32 %v3148, %v3149
        %v3151 = vmax.f32 %v3074, %v3075
        %v3152 = vrot.slane %v3151, 4
        %v3153 = vmax.f32 %v3151, %v3152
        %v3154 = vrot.slane %v3153, 2
        %v3155 = vmax.f32 %v3153, %v3154
        %v3156 = vrot.slane %v3155, 1
        %v3157 = vmax.f32 %v3155, %v3156
        %v3158 = vmax.f32 %v3076, %v3077
        %v3159 = vrot.slane %v3158, 4
        %v3160 = vmax.f32 %v3158, %v3159
        %v3161 = vrot.slane %v3160, 2
        %v3162 = vmax.f32 %v3160, %v3161
        %v3163 = vrot.slane %v3162, 1
        %v3164 = vmax.f32 %v3162, %v3163
        %v3165 = vmax.f32 %v3078, %v3079
        %v3166 = vrot.slane %v3165, 4
        %v3167 = vmax.f32 %v3165, %v3166
        %v3168 = vrot.slane %v3167, 2
        %v3169 = vmax.f32 %v3167, %v3168
        %v3170 = vrot.slane %v3169, 1
        %v3171 = vmax.f32 %v3169, %v3170
        %v3172 = vmax.f32 %v3080, %v3081
        %v3173 = vrot.slane %v3172, 4
        %v3174 = vmax.f32 %v3172, %v3173
        %v3175 = vrot.slane %v3174, 2
        %v3176 = vmax.f32 %v3174, %v3175
        %v3177 = vrot.slane %v3176, 1
        %v3178 = vmax.f32 %v3176, %v3177
        %v3179 = vmax.f32 %v3082, %v3083
        %v3180 = vrot.slane %v3179, 4
        %v3181 = vmax.f32 %v3179, %v3180
        %v3182 = vrot.slane %v3181, 2
        %v3183 = vmax.f32 %v3181, %v3182
        %v3184 = vrot.slane %v3183, 1
        %v3185 = vmax.f32 %v3183, %v3184
        %v3186 = vmax.f32 %v3084, %v3085
        %v3187 = vrot.slane %v3186, 4
        %v3188 = vmax.f32 %v3186, %v3187
        %v3189 = vrot.slane %v3188, 2
        %v3190 = vmax.f32 %v3188, %v3189
        %v3191 = vrot.slane %v3190, 1
        %v3192 = vmax.f32 %v3190, %v3191
        %v3193 = vmax.f32 %v3086, %v3087
        %v3194 = vrot.slane %v3193, 4
        %v3195 = vmax.f32 %v3193, %v3194
        %v3196 = vrot.slane %v3195, 2
        %v3197 = vmax.f32 %v3195, %v3196
        %v3198 = vrot.slane %v3197, 1
        %v3199 = vmax.f32 %v3197, %v3198
        %v3200 = vld [vmem:[%s2] sm:$0x1]
        %v3202 = vlaneseq
        %v3203 = vshrl.u32 %v3202, 7
        %v3204 = vsub.s32 0, %v3203
        %v3205 = vrot.slane %v3200, %v3204
        %v3207 = vadd.f32 %v3094, %v3205
        %v3208 = vadd.f32 %v3101, %v3205
        %v3209 = vadd.f32 %v3108, %v3205
        %v3210 = vadd.f32 %v3115, %v3205
        %v3211 = vadd.f32 %v3122, %v3205
        %v3212 = vadd.f32 %v3129, %v3205
        %v3213 = vadd.f32 %v3136, %v3205
        %v3214 = vadd.f32 %v3143, %v3205
        %v3215 = vadd.f32 %v3150, %v3205
        %v3216 = vadd.f32 %v3157, %v3205
        %v3217 = vadd.f32 %v3164, %v3205
        %v3218 = vadd.f32 %v3171, %v3205
        %v3219 = vadd.f32 %v3178, %v3205
        %v3220 = vadd.f32 %v3185, %v3205
        %v3221 = vadd.f32 %v3192, %v3205
        %v3222 = vadd.f32 %v3199, %v3205
        %v3223 = vmax.f32 %v3207, 0.0
        %v3224 = vmax.f32 %v3208, 0.0
        %v3225 = vmax.f32 %v3209, 0.0
        %v3226 = vmax.f32 %v3210, 0.0
        %v3227 = vmax.f32 %v3211, 0.0
        %v3228 = vmax.f32 %v3212, 0.0
        %v3229 = vmax.f32 %v3213, 0.0
        %v3230 = vmax.f32 %v3214, 0.0
        %v3231 = vmax.f32 %v3215, 0.0
        %v3232 = vmax.f32 %v3216, 0.0
        %v3233 = vmax.f32 %v3217, 0.0
        %v3234 = vmax.f32 %v3218, 0.0
        %v3235 = vmax.f32 %v3219, 0.0
        %v3236 = vmax.f32 %v3220, 0.0
        %v3237 = vmax.f32 %v3221, 0.0
        %v3238 = vmax.f32 %v3222, 0.0
        %v3239 = vpack.c.bf16 %v3223, %v3223
        %v3240 = vpack.c.bf16 %v3224, %v3224
        %v3241 = vpack.c.bf16 %v3225, %v3225
        %v3242 = vpack.c.bf16 %v3226, %v3226
        %v3243 = vpack.c.bf16 %v3227, %v3227
        %v3244 = vpack.c.bf16 %v3228, %v3228
        %v3245 = vpack.c.bf16 %v3229, %v3229
        %v3246 = vpack.c.bf16 %v3230, %v3230
        %v3247 = vpack.c.bf16 %v3231, %v3231
        %v3248 = vpack.c.bf16 %v3232, %v3232
        %v3249 = vpack.c.bf16 %v3233, %v3233
        %v3250 = vpack.c.bf16 %v3234, %v3234
        %v3251 = vpack.c.bf16 %v3235, %v3235
        %v3252 = vpack.c.bf16 %v3236, %v3236
        %v3253 = vpack.c.bf16 %v3237, %v3237
        %v3254 = vpack.c.bf16 %v3238, %v3238
        %v3255 = vld [vmem:[#allocation7] sm:$0xf]
        %v3256 = vld [vmem:[#allocation7 + $0x4] sm:$0xf]
        %v3257 = vld [vmem:[#allocation7 + $0x8] sm:$0xf]
        %v3258 = vld [vmem:[#allocation7 + $0xc] sm:$0xf]
        %v3259 = vld [vmem:[#allocation7 + $0x10] sm:$0xf]
        %v3260 = vld [vmem:[#allocation7 + $0x14] sm:$0xf]
        %v3261 = vld [vmem:[#allocation7 + $0x18] sm:$0xf]
        %v3262 = vld [vmem:[#allocation7 + $0x1c] sm:$0xf]
        %v3263 = vld [vmem:[#allocation7 + $0x20] sm:$0xf]
        %v3264 = vld [vmem:[#allocation7 + $0x24] sm:$0xf]
        %v3265 = vld [vmem:[#allocation7 + $0x28] sm:$0xf]
        %v3266 = vld [vmem:[#allocation7 + $0x2c] sm:$0xf]
        %v3267 = vld [vmem:[#allocation7 + $0x30] sm:$0xf]
        %v3268 = vld [vmem:[#allocation7 + $0x34] sm:$0xf]
        %v3269 = vld [vmem:[#allocation7 + $0x38] sm:$0xf]
        %v3270 = vld [vmem:[#allocation7 + $0x3c] sm:$0xf]
        %v3271 = vld [vmem:[%s4] sm:$0x1]
        %v3273 = vlaneseq
        %v3274 = vshrl.u32 %v3273, 7
        %v3275 = vsub.s32 0, %v3274
        %v3276 = vrot.slane %v3271, %v3275
        %v3294 = vunpack.c.l.b16 %v3239
        %v3295 = vunpack.c.l.b16 %v3240
        %v3296 = vunpack.c.l.b16 %v3241
        %v3297 = vunpack.c.l.b16 %v3242
        %v3298 = vunpack.c.l.b16 %v3243
        %v3299 = vunpack.c.l.b16 %v3244
        %v3300 = vunpack.c.l.b16 %v3245
        %v3301 = vunpack.c.l.b16 %v3246
        %v3302 = vunpack.c.l.b16 %v3247
        %v3303 = vunpack.c.l.b16 %v3248
        %v3304 = vunpack.c.l.b16 %v3249
        %v3305 = vunpack.c.l.b16 %v3250
        %v3306 = vunpack.c.l.b16 %v3251
        %v3307 = vunpack.c.l.b16 %v3252
        %v3308 = vunpack.c.l.b16 %v3253
        %v3309 = vunpack.c.l.b16 %v3254
        %v3310 = vrot.slane %v3295, 7
        %vm3311 = vcmask 1041409
        %v3312 = vsel %vm3311, %v3310, %v3294
        %v3313 = vrot.slane %v3296, 6
        %vm3314 = vcmask 1042434
        %v3315 = vsel %vm3314, %v3313, %v3312
        %v3316 = vrot.slane %v3297, 5
        %vm3317 = vcmask 1043459
        %v3318 = vsel %vm3317, %v3316, %v3315
        %v3319 = vrot.slane %v3298, 4
        %vm3320 = vcmask 1044484
        %v3321 = vsel %vm3320, %v3319, %v3318
        %v3322 = vrot.slane %v3299, 3
        %vm3323 = vcmask 1045509
        %v3324 = vsel %vm3323, %v3322, %v3321
        %v3325 = vrot.slane %v3300, 2
        %vm3326 = vcmask 1046534
        %v3327 = vsel %vm3326, %v3325, %v3324
        %v3328 = vrot.slane %v3301, 1
        %vm3329 = vcmask 1047559
        %v3330 = vsel %vm3329, %v3328, %v3327
        %v3331 = vrot.slane %v3303, 7
        %v3332 = vsel %vm3311, %v3331, %v3302
        %v3333 = vrot.slane %v3304, 6
        %v3334 = vsel %vm3314, %v3333, %v3332
        %v3335 = vrot.slane %v3305, 5
        %v3336 = vsel %vm3317, %v3335, %v3334
        %v3337 = vrot.slane %v3306, 4
        %v3338 = vsel %vm3320, %v3337, %v3336
        %v3339 = vrot.slane %v3307, 3
        %v3340 = vsel %vm3323, %v3339, %v3338
        %v3341 = vrot.slane %v3308, 2
        %v3342 = vsel %vm3326, %v3341, %v3340
        %v3343 = vrot.slane %v3309, 1
        %v3344 = vsel %vm3329, %v3343, %v3342
        %v3345 = vpack.c.b16 %v3344, %v3330
        %v3363 = vunpack.c.l.b16 %v3255
        %v3364 = vunpack.c.l.b16 %v3256
        %v3365 = vunpack.c.l.b16 %v3257
        %v3366 = vunpack.c.l.b16 %v3258
        %v3367 = vunpack.c.l.b16 %v3259
        %v3368 = vunpack.c.l.b16 %v3260
        %v3369 = vunpack.c.l.b16 %v3261
        %v3370 = vunpack.c.l.b16 %v3262
        %v3371 = vunpack.c.l.b16 %v3263
        %v3372 = vunpack.c.l.b16 %v3264
        %v3373 = vunpack.c.l.b16 %v3265
        %v3374 = vunpack.c.l.b16 %v3266
        %v3375 = vunpack.c.l.b16 %v3267
        %v3376 = vunpack.c.l.b16 %v3268
        %v3377 = vunpack.c.l.b16 %v3269
        %v3378 = vunpack.c.l.b16 %v3270
        %v3379 = vpack.c.b16 %v3364, %v3363
        %v3380 = vpack.c.b16 %v3366, %v3365
        %v3381 = vpack.c.b16 %v3368, %v3367
        %v3382 = vpack.c.b16 %v3370, %v3369
        %v3383 = vpack.c.b16 %v3372, %v3371
        %v3384 = vpack.c.b16 %v3374, %v3373
        %v3385 = vpack.c.b16 %v3376, %v3375
        %v3386 = vpack.c.b16 %v3378, %v3377
        %3395 = vmatprep.subr.bf16.mxu0 0
        %3396 = vmatpush1.bf16.msra.mxu0 %v3386
        %3397 = vmatprep.subr.bf16.mxu0 0
        %3398 = vmatpush1.bf16.msra.mxu0 %v3385
        %3399 = vmatprep.subr.bf16.mxu0 0
        %3400 = vmatpush1.bf16.msra.mxu0 %v3384
        %3401 = vmatprep.subr.bf16.mxu0 0
        %3402 = vmatpush1.bf16.msra.mxu0 %v3383
        %3403 = vmatprep.subr.bf16.mxu0 0
        %3404 = vmatpush1.bf16.msra.mxu0 %v3382
        %3405 = vmatprep.subr.bf16.mxu0 0
        %3406 = vmatpush1.bf16.msra.mxu0 %v3381
        %3407 = vmatprep.subr.bf16.mxu0 0
        %3408 = vmatpush1.bf16.msra.mxu0 %v3380
        %3409 = vmatprep.subr.bf16.mxu0 0
        %3410 = vmatpush1.bf16.msra.mxu0 %v3379
        %3411 = vmatprep.subr.bf16.mxu0 0
        %3412 = vmatpush2.bf16.msra.mxu0 0
        %3413 = vmatprep.subr.bf16.mxu0 0
        %3414 = vmatpush2.bf16.msra.mxu0 0
        %3415 = vmatprep.subr.bf16.mxu0 0
        %3416 = vmatpush2.bf16.msra.mxu0 0
        %3417 = vmatprep.subr.bf16.mxu0 0
        %3418 = vmatpush2.bf16.msra.mxu0 0
        %3419 = vmatprep.subr.bf16.mxu0 0
        %3420 = vmatpush2.bf16.msra.mxu0 0
        %3421 = vmatprep.subr.bf16.mxu0 0
        %3422 = vmatpush2.bf16.msra.mxu0 0
        %3423 = vmatprep.subr.bf16.mxu0 0
        %3424 = vmatpush2.bf16.msra.mxu0 0
        %3425 = vmatprep.subr.bf16.mxu0 0
        %3426 = vmatpush2.bf16.msra.mxu0 0
        %3427 = vmatprep.mubr.bf16.mxu0 0
        %3428 = vmatmul.mubr.bf16.gmra.mxu0 %v3345
        %v3429 = vpop.f32.mrf.mxu0
        %v3430 = vadd.f32 %v3276, %v3429
        %v3431 = vpop.f32.mrf.mxu0
        %v3432 = vpop.f32.mrf.mxu0
        %v3433 = vadd.f32 %v3276, %v3432
        %v3434 = vpop.f32.mrf.mxu0
        %3435 = vdwg.mxu0
        %3436 = vst [vmem:[%s272] sm:$0xff] %v3430
        %3437 = vst [vmem:[%s272 + $0x8] sm:$0xff] %v3433
        %s3438 = sand.u32 %s141, 1
        %s3439 = scalar_lea.sflag [#allocation4], %s3438
        %s3440 = sand.u32 %s141, 1
        %s3441 = smul.addr %s3440, 16
        %s3442 = scalar_lea.vmem [#allocation8], %s3441
        // Predicated region
        $region53: #{tpu_custom_call.1} parent=39 // pred_check
          %p3443 = pneg %p151
        $region54: #{tpu_custom_call.1} parent=39 // pred_check_branch
          %3445 = sbr.rel (%p3443) target = $region56
        $region55: #{tpu_custom_call.1} parent=39 // pred_region
          %s3446 = smul.u32 2, %s23
          %s3448 = ssub.s32 256, 256
          %3449 = vsyncadd %s3439, %s3448
          %s3450 = smul.addr %s3446, 128
          %s3451 = scalar_lea.hbm %s5, %s3450
          %s3452 = sshll.u32 %s3442, 4
          %s3453 = int_to_ptr.vmem [resolvable:$true] %s3452
          %3458 = dma.vmem_to_hbm [thread:$0]  %s3453, 256, %s3451, %s3439, 128, 128, 8
        $region56: #{tpu_custom_call.1} parent=39 // pred_fallthru
          _
      $region40: #{tpu_custom_call.1} parent=5 // pred_fallthru
        _
      %p3459 = scmp.le.s32.totalorder 2, %s18
      // Predicated region
      $region57: #{tpu_custom_call.1} parent=5 // pred_check
        %p3460 = pneg %p3459
      $region58: #{tpu_custom_call.1} parent=5 // pred_check_branch
        %3462 = sbr.rel (%p3460) target = $region60
      $region59: #{tpu_custom_call.1} parent=5 // pred_region
        %s3463 = ssub.s32 %s18, 2
        // Predicated region
        $region61: #{tpu_custom_call.1} parent=59 // pred_check
          %p3464 = pneg %p157
        $region62: #{tpu_custom_call.1} parent=59 // pred_check_branch
          %3466 = sbr.rel (%p3464) target = $region64
        $region63: #{tpu_custom_call.1} parent=59 // pred_region
          %s3467 = sand.u32 %s142, 1
          %s3468 = scalar_lea.sflag [#allocation4], %s3467
          %s3469 = sand.u32 %s142, 1
          %s3470 = smul.addr %s3469, 16
          %s3471 = scalar_lea.vmem [#allocation8], %s3470
          %3472 = dma.done %s3468, 256
        $region64: #{tpu_custom_call.1} parent=59 // pred_fallthru
          _
      $region60: #{tpu_custom_call.1} parent=5 // pred_fallthru
        _
    $region6: #{tpu_custom_call.1} parent=1 // loop_footer
      %s22 = sadd.s32 1, %s18
    $region7: #{tpu_custom_call.1} parent=1 // loop_footer_branch
      %17 = sbr.rel target = $region3
    $region8: #{tpu_custom_call.1} parent=1 // loop_exit
      _
    %3473 = vsyncpa [#allocation3], 1
    %s3474 = scalar_lea.sflag [#allocation3], 1
    %3475 = vsyncpa %s3474, 1
    %3476 = vsyncpa [#allocation6], 1
    %3477 = vsyncpa [#allocation4], 1
    %s3478 = scalar_lea.sflag [#allocation4], 1
    %3479 = vsyncpa %s3478, 1

</llo_original>
